<compile_context>
chip_gen: v7x
topology: tpu7x:2x2x1
jax: 0.10.0
libtpu: 0.0.40
codegen_flags: <defaults>
</compile_context>

<pallas_src>
import functools
import math
from fractions import Fraction

import jax
import jax.numpy as jnp
from jax.experimental import pallas as pl
from jax.experimental.pallas import tpu as pltpu


def _text_masking_kernel(meta_ref, rbits_ref, ids_ref, out_ids_ref, out_mask_ref,
                         *, mask_token_id, pos_bits):
    TB, S = ids_ref.shape

    nt = meta_ref[:, 0:1]                    # (TB, 1) maskable tokens per row
    nm = meta_ref[:, 1:2]                    # (TB, 1) tokens to mask per row

    pos = jax.lax.broadcasted_iota(jnp.int32, (TB, S), 1)
    is_cand = (pos >= 1) & (pos <= nt)       # candidate positions 1 .. num_tokens

    # Unique nonnegative per-row sort key: random high bits, position in the low bits.
    high_mask = jnp.int32((0x7FFFFFFF >> pos_bits) << pos_bits)
    key = (rbits_ref[...] & high_mask) | pos             # (TB, S) int32, >= 1 on candidates

    # Bitwise radix-select of the nm smallest candidate keys per row (vectorized over
    # all TB rows).  `match` = candidates still compatible with the nm-th smallest key,
    # `selected` = candidates already known to be strictly below it.
    match = is_cand
    selected = jnp.zeros((TB, S), dtype=jnp.bool_)
    k = nm                                                # (TB, 1) remaining rank
    for b in range(30, -1, -1):                           # keys are 31-bit nonnegative
        bitval = jnp.int32(1 << b)
        bit_is_zero = (key & bitval) == 0                 # (TB, S)
        in_zero = match & bit_is_zero
        cnt0 = jnp.sum(in_zero.astype(jnp.int32), axis=1, keepdims=True)   # (TB, 1)
        go_zero = k <= cnt0                               # (TB, 1)
        not_go = jnp.logical_not(go_zero)
        # When the threshold takes bit b = 1, every matching key with bit b = 0 is
        # strictly smaller than the threshold -> select it.
        selected = selected | (in_zero & not_go)
        # Keep only keys whose bit b equals the threshold's bit b.
        match = match & (bit_is_zero == go_zero)
        k = jnp.where(go_zero, k, k - cnt0)
    # The nm-th smallest key itself (exactly one candidate when nm > 0, empty when nm == 0).
    selected = selected | match

    out_mask_ref[...] = selected.astype(jnp.int32)
    out_ids_ref[...] = jnp.where(selected, jnp.int32(mask_token_id), ids_ref[...])


def _ceil_ratio(n, mask_ratio):
    # Exact integer ceil(mask_ratio * n) for typical ratios (e.g. 0.3 -> 3/10), avoiding
    # the float32 rounding off-by-one the previous version had.
    frac = Fraction(float(mask_ratio)).limit_denominator(1 << 12)
    p, q = frac.numerator, frac.denominator
    return (p * n + (q - 1)) // q


@functools.partial(jax.jit, static_argnames=("mask_token_id", "mask_ratio", "row_block"))
def text_masking_transform_batch(input_ids, attention_mask, rng_key, *,
                                 mask_token_id, mask_ratio=0.3, row_block=8):
    """Batched masking: input_ids/attention_mask are (B, S) int arrays."""
    input_ids = jnp.asarray(input_ids, jnp.int32)
    attention_mask = jnp.asarray(attention_mask, jnp.int32)
    B, S = input_ids.shape
    TB = row_block
    pos_bits = max((S - 1).bit_length(), 1)

    # Scalar preamble done outside the kernel's vector units.
    num_tokens = jnp.maximum(jnp.sum(attention_mask, axis=-1, dtype=jnp.int32) - 2, 0)
    num_masked = _ceil_ratio(num_tokens, mask_ratio)      # rows with < 2 tokens mask nothing
    meta = jnp.stack([num_tokens, num_masked], axis=-1).astype(jnp.int32)   # (B, 2)

    # Hardware-PRNG-free randomness (pltpu.prng_* has no interpret/CPU lowering).
    rbits = jax.random.randint(rng_key, (B, S), 0, jnp.iinfo(jnp.int32).max,
                               dtype=jnp.int32)

    n_blocks = (B + TB - 1) // TB
    Bp = n_blocks * TB
    if Bp != B:
        pad = ((0, Bp - B), (0, 0))
        input_ids_p = jnp.pad(input_ids, pad)
        rbits_p = jnp.pad(rbits, pad)
        meta_p = jnp.pad(meta, pad)       # padded rows: num_tokens = num_masked = 0
    else:
        input_ids_p, rbits_p, meta_p = input_ids, rbits, meta

    kernel = functools.partial(_text_masking_kernel,
                               mask_token_id=int(mask_token_id), pos_bits=pos_bits)

    out_ids, out_mask = pl.pallas_call(
        kernel,
        out_shape=(jax.ShapeDtypeStruct((Bp, S), jnp.int32),
                   jax.ShapeDtypeStruct((Bp, S), jnp.int32)),
        grid=(n_blocks,),
        in_specs=[
            pl.BlockSpec((TB, 2), lambda i: (i, 0)),      # meta (num_tokens, num_masked)
            pl.BlockSpec((TB, S), lambda i: (i, 0)),      # random bits
            pl.BlockSpec((TB, S), lambda i: (i, 0)),      # input ids
        ],
        out_specs=(
            pl.BlockSpec((TB, S), lambda i: (i, 0)),      # masked ids
            pl.BlockSpec((TB, S), lambda i: (i, 0)),      # mask (int32; bool-ified outside)
        ),
        input_output_aliases={2: 0},                      # ids output reuses ids input buffer
        compiler_params=pltpu.CompilerParams(dimension_semantics=("parallel",)),
    )(meta_p, rbits_p, input_ids_p)

    return out_ids[:B], out_mask[:B].astype(jnp.bool_)


def text_masking_transform(tokens, mask_token_id, rng_key, mask_ratio=0.3):
    """Mirrors TextMaskingTransform.forward for a single tokenized sequence dict."""
    ids = jnp.asarray(tokens["input_ids"], jnp.int32)
    am = jnp.asarray(tokens["attention_mask"], jnp.int32)
    single = ids.ndim == 1
    if single:
        ids, am = ids[None, :], am[None, :]
    out_ids, mask = text_masking_transform_batch(
        ids, am, rng_key, mask_token_id=int(mask_token_id), mask_ratio=float(mask_ratio))
    if single:
        out_ids, mask = out_ids[0], mask[0]
    masked_tokens = dict(tokens)                          # shallow copy; only input_ids replaced
    masked_tokens["input_ids"] = out_ids
    return masked_tokens, mask


if __name__ == "__main__":
    import numpy as np

    B, S = 16, 128
    mask_ratio = 0.3
    mask_token_id = 103

    root = jax.random.PRNGKey(0)
    k_len, k_ids, k_rng, k_rng1 = jax.random.split(root, 4)

    # [CLS] + words + [SEP] per row, variable lengths to exercise per-row behaviour.
    valid_len = jax.random.randint(k_len, (B,), 4, 41, dtype=jnp.int32)
    attention_mask = (jnp.arange(S)[None, :] < valid_len[:, None]).astype(jnp.int32)
    input_ids = jax.random.randint(k_ids, (B, S), 1000, 2000, dtype=jnp.int32)
    input_ids = jnp.where(attention_mask == 1, input_ids, 0)

    # Host snapshots of the inputs (taken before the aliased kernel call).
    in_np = np.asarray(jax.device_get(input_ids))
    am_np = np.asarray(jax.device_get(attention_mask))

    out_ids, mask = text_masking_transform_batch(
        input_ids, attention_mask, k_rng,
        mask_token_id=mask_token_id, mask_ratio=mask_ratio)
    jax.block_until_ready((out_ids, mask))

    out_np = np.asarray(jax.device_get(out_ids))
    mask_np = np.asarray(jax.device_get(mask))

    for b in range(B):
        n_tok = int(am_np[b].sum()) - 2
        n_mask = math.ceil(mask_ratio * n_tok)
        sel = mask_np[b]
        assert int(sel.sum()) == n_mask, (b, int(sel.sum()), n_mask)
        assert not sel[0]                                 # [CLS] never masked
        assert not sel[n_tok + 1:].any()                  # [SEP] / padding never masked
        assert (out_np[b][sel] == mask_token_id).all()
        assert (out_np[b][~sel] == in_np[b][~sel]).all()

    # Module-faithful single-sequence API (dict in -> (dict, mask) out).
    tokens = {"input_ids": input_ids[0], "attention_mask": attention_mask[0]}
    masked_tokens, mask0 = text_masking_transform(tokens, mask_token_id, k_rng1, mask_ratio)
    jax.block_until_ready((masked_tokens["input_ids"], mask0))
    n_tok0 = int(am_np[0].sum()) - 2
    assert int(np.asarray(jax.device_get(mask0)).sum()) == math.ceil(mask_ratio * n_tok0)
    assert masked_tokens["attention_mask"] is tokens["attention_mask"]

    print("KERNEL_OK")
</pallas_src>

<mosaic_0001>
module attributes {stable_mosaic.version = 11 : i64} {
  func.func @_text_masking_kernel(%arg0: i32, %arg1: memref<8x2xi32, #tpu.memory_space<vmem>>, %arg2: memref<8x128xi32, #tpu.memory_space<vmem>>, %arg3: memref<8x128xi32, #tpu.memory_space<vmem>>, %arg4: memref<8x128xi32, #tpu.memory_space<vmem>>, %arg5: memref<8x128xi32, #tpu.memory_space<vmem>>) attributes {dimension_semantics = [#tpu.dimension_semantics<parallel>], iteration_bounds = array<i64: 2>, scalar_prefetch = 0 : i64, scratch_operands = 0 : i64, tpu.core_type = #tpu.core_type<tc>, window_params = [{transform_indices = @transform_0, window_bounds = array<i64: 8, 2>}, {transform_indices = @transform_1, window_bounds = array<i64: 8, 128>}, {transform_indices = @transform_2, window_bounds = array<i64: 8, 128>}, {transform_indices = @transform_3, window_bounds = array<i64: 8, 128>}, {transform_indices = @transform_4, window_bounds = array<i64: 8, 128>}]} {
    %c0 = arith.constant 0 : index
    %c0_0 = arith.constant 0 : index
    %0 = vector.load %arg1[%c0, %c0_0] : memref<8x2xi32, #tpu.memory_space<vmem>>, vector<8x1xi32>
    %c0_1 = arith.constant 0 : index
    %c1 = arith.constant 1 : index
    %1 = vector.load %arg1[%c0_1, %c1] : memref<8x2xi32, #tpu.memory_space<vmem>>, vector<8x1xi32>
    %2 = tpu.iota {dimensions = array<i32: 1>} : vector<8x128xi32>
    %c1_i32 = arith.constant 1 : i32
    %3 = vector.broadcast %c1_i32 : i32 to vector<8x128xi32>
    %4 = arith.cmpi sge, %2, %3 : vector<8x128xi32>
    %5 = vector.broadcast %0 : vector<8x1xi32> to vector<8x128xi32>
    %6 = arith.cmpi sle, %2, %5 : vector<8x128xi32>
    %7 = arith.andi %4, %6 : vector<8x128xi1>
    %c0_2 = arith.constant 0 : index
    %c0_3 = arith.constant 0 : index
    %8 = vector.load %arg2[%c0_2, %c0_3] : memref<8x128xi32, #tpu.memory_space<vmem>>, vector<8x128xi32>
    %c2147483520_i32 = arith.constant 2147483520 : i32
    %9 = vector.broadcast %c2147483520_i32 : i32 to vector<8x128xi32>
    %10 = arith.andi %8, %9 : vector<8x128xi32>
    %11 = arith.ori %10, %2 : vector<8x128xi32>
    %false = arith.constant false
    %12 = vector.broadcast %false : i1 to vector<8x128xi1>
    %c1073741824_i32 = arith.constant 1073741824 : i32
    %13 = vector.broadcast %c1073741824_i32 : i32 to vector<8x128xi32>
    %14 = arith.andi %11, %13 : vector<8x128xi32>
    %c0_i32 = arith.constant 0 : i32
    %15 = vector.broadcast %c0_i32 : i32 to vector<8x128xi32>
    %16 = arith.cmpi eq, %14, %15 : vector<8x128xi32>
    %17 = arith.andi %7, %16 : vector<8x128xi1>
    %18 = arith.extui %17 : vector<8x128xi1> to vector<8x128xi32>
    %cst = arith.constant dense<0> : vector<8xi32>
    %19 = vector.multi_reduction <add>, %18, %cst [1] : vector<8x128xi32> to vector<8xi32>
    %20 = vector.shape_cast %19 : vector<8xi32> to vector<8x1xi32>
    %21 = arith.cmpi sle, %1, %20 : vector<8x1xi32>
    %cst_4 = arith.constant dense<true> : vector<8x1xi1>
    %22 = arith.xori %21, %cst_4 : vector<8x1xi1>
    %23 = vector.broadcast %22 : vector<8x1xi1> to vector<8x128xi1>
    %24 = arith.andi %17, %23 : vector<8x128xi1>
    %25 = arith.ori %12, %24 : vector<8x128xi1>
    %26 = vector.broadcast %21 : vector<8x1xi1> to vector<8x128xi1>
    %27 = vector.broadcast %26 : vector<8x128xi1> to vector<8x128xi1>
    %28 = arith.xori %16, %27 : vector<8x128xi1>
    %cst_5 = arith.constant dense<true> : vector<8x128xi1>
    %29 = arith.xori %28, %cst_5 : vector<8x128xi1>
    %30 = arith.andi %7, %29 : vector<8x128xi1>
    %31 = arith.subi %1, %20 : vector<8x1xi32>
    %32 = arith.select %21, %1, %31 : vector<8x1xi1>, vector<8x1xi32>
    %c536870912_i32 = arith.constant 536870912 : i32
    %33 = vector.broadcast %c536870912_i32 : i32 to vector<8x128xi32>
    %34 = arith.andi %11, %33 : vector<8x128xi32>
    %c0_i32_6 = arith.constant 0 : i32
    %35 = vector.broadcast %c0_i32_6 : i32 to vector<8x128xi32>
    %36 = arith.cmpi eq, %34, %35 : vector<8x128xi32>
    %37 = arith.andi %30, %36 : vector<8x128xi1>
    %38 = arith.extui %37 : vector<8x128xi1> to vector<8x128xi32>
    %cst_7 = arith.constant dense<0> : vector<8xi32>
    %39 = vector.multi_reduction <add>, %38, %cst_7 [1] : vector<8x128xi32> to vector<8xi32>
    %40 = vector.shape_cast %39 : vector<8xi32> to vector<8x1xi32>
    %41 = arith.cmpi sle, %32, %40 : vector<8x1xi32>
    %cst_8 = arith.constant dense<true> : vector<8x1xi1>
    %42 = arith.xori %41, %cst_8 : vector<8x1xi1>
    %43 = vector.broadcast %42 : vector<8x1xi1> to vector<8x128xi1>
    %44 = arith.andi %37, %43 : vector<8x128xi1>
    %45 = arith.ori %25, %44 : vector<8x128xi1>
    %46 = vector.broadcast %41 : vector<8x1xi1> to vector<8x128xi1>
    %47 = vector.broadcast %46 : vector<8x128xi1> to vector<8x128xi1>
    %48 = arith.xori %36, %47 : vector<8x128xi1>
    %cst_9 = arith.constant dense<true> : vector<8x128xi1>
    %49 = arith.xori %48, %cst_9 : vector<8x128xi1>
    %50 = arith.andi %30, %49 : vector<8x128xi1>
    %51 = arith.subi %32, %40 : vector<8x1xi32>
    %52 = arith.select %41, %32, %51 : vector<8x1xi1>, vector<8x1xi32>
    %c268435456_i32 = arith.constant 268435456 : i32
    %53 = vector.broadcast %c268435456_i32 : i32 to vector<8x128xi32>
    %54 = arith.andi %11, %53 : vector<8x128xi32>
    %c0_i32_10 = arith.constant 0 : i32
    %55 = vector.broadcast %c0_i32_10 : i32 to vector<8x128xi32>
    %56 = arith.cmpi eq, %54, %55 : vector<8x128xi32>
    %57 = arith.andi %50, %56 : vector<8x128xi1>
    %58 = arith.extui %57 : vector<8x128xi1> to vector<8x128xi32>
    %cst_11 = arith.constant dense<0> : vector<8xi32>
    %59 = vector.multi_reduction <add>, %58, %cst_11 [1] : vector<8x128xi32> to vector<8xi32>
    %60 = vector.shape_cast %59 : vector<8xi32> to vector<8x1xi32>
    %61 = arith.cmpi sle, %52, %60 : vector<8x1xi32>
    %cst_12 = arith.constant dense<true> : vector<8x1xi1>
    %62 = arith.xori %61, %cst_12 : vector<8x1xi1>
    %63 = vector.broadcast %62 : vector<8x1xi1> to vector<8x128xi1>
    %64 = arith.andi %57, %63 : vector<8x128xi1>
    %65 = arith.ori %45, %64 : vector<8x128xi1>
    %66 = vector.broadcast %61 : vector<8x1xi1> to vector<8x128xi1>
    %67 = vector.broadcast %66 : vector<8x128xi1> to vector<8x128xi1>
    %68 = arith.xori %56, %67 : vector<8x128xi1>
    %cst_13 = arith.constant dense<true> : vector<8x128xi1>
    %69 = arith.xori %68, %cst_13 : vector<8x128xi1>
    %70 = arith.andi %50, %69 : vector<8x128xi1>
    %71 = arith.subi %52, %60 : vector<8x1xi32>
    %72 = arith.select %61, %52, %71 : vector<8x1xi1>, vector<8x1xi32>
    %c134217728_i32 = arith.constant 134217728 : i32
    %73 = vector.broadcast %c134217728_i32 : i32 to vector<8x128xi32>
    %74 = arith.andi %11, %73 : vector<8x128xi32>
    %c0_i32_14 = arith.constant 0 : i32
    %75 = vector.broadcast %c0_i32_14 : i32 to vector<8x128xi32>
    %76 = arith.cmpi eq, %74, %75 : vector<8x128xi32>
    %77 = arith.andi %70, %76 : vector<8x128xi1>
    %78 = arith.extui %77 : vector<8x128xi1> to vector<8x128xi32>
    %cst_15 = arith.constant dense<0> : vector<8xi32>
    %79 = vector.multi_reduction <add>, %78, %cst_15 [1] : vector<8x128xi32> to vector<8xi32>
    %80 = vector.shape_cast %79 : vector<8xi32> to vector<8x1xi32>
    %81 = arith.cmpi sle, %72, %80 : vector<8x1xi32>
    %cst_16 = arith.constant dense<true> : vector<8x1xi1>
    %82 = arith.xori %81, %cst_16 : vector<8x1xi1>
    %83 = vector.broadcast %82 : vector<8x1xi1> to vector<8x128xi1>
    %84 = arith.andi %77, %83 : vector<8x128xi1>
    %85 = arith.ori %65, %84 : vector<8x128xi1>
    %86 = vector.broadcast %81 : vector<8x1xi1> to vector<8x128xi1>
    %87 = vector.broadcast %86 : vector<8x128xi1> to vector<8x128xi1>
    %88 = arith.xori %76, %87 : vector<8x128xi1>
    %cst_17 = arith.constant dense<true> : vector<8x128xi1>
    %89 = arith.xori %88, %cst_17 : vector<8x128xi1>
    %90 = arith.andi %70, %89 : vector<8x128xi1>
    %91 = arith.subi %72, %80 : vector<8x1xi32>
    %92 = arith.select %81, %72, %91 : vector<8x1xi1>, vector<8x1xi32>
    %c67108864_i32 = arith.constant 67108864 : i32
    %93 = vector.broadcast %c67108864_i32 : i32 to vector<8x128xi32>
    %94 = arith.andi %11, %93 : vector<8x128xi32>
    %c0_i32_18 = arith.constant 0 : i32
    %95 = vector.broadcast %c0_i32_18 : i32 to vector<8x128xi32>
    %96 = arith.cmpi eq, %94, %95 : vector<8x128xi32>
    %97 = arith.andi %90, %96 : vector<8x128xi1>
    %98 = arith.extui %97 : vector<8x128xi1> to vector<8x128xi32>
    %cst_19 = arith.constant dense<0> : vector<8xi32>
    %99 = vector.multi_reduction <add>, %98, %cst_19 [1] : vector<8x128xi32> to vector<8xi32>
    %100 = vector.shape_cast %99 : vector<8xi32> to vector<8x1xi32>
    %101 = arith.cmpi sle, %92, %100 : vector<8x1xi32>
    %cst_20 = arith.constant dense<true> : vector<8x1xi1>
    %102 = arith.xori %101, %cst_20 : vector<8x1xi1>
    %103 = vector.broadcast %102 : vector<8x1xi1> to vector<8x128xi1>
    %104 = arith.andi %97, %103 : vector<8x128xi1>
    %105 = arith.ori %85, %104 : vector<8x128xi1>
    %106 = vector.broadcast %101 : vector<8x1xi1> to vector<8x128xi1>
    %107 = vector.broadcast %106 : vector<8x128xi1> to vector<8x128xi1>
    %108 = arith.xori %96, %107 : vector<8x128xi1>
    %cst_21 = arith.constant dense<true> : vector<8x128xi1>
    %109 = arith.xori %108, %cst_21 : vector<8x128xi1>
    %110 = arith.andi %90, %109 : vector<8x128xi1>
    %111 = arith.subi %92, %100 : vector<8x1xi32>
    %112 = arith.select %101, %92, %111 : vector<8x1xi1>, vector<8x1xi32>
    %c33554432_i32 = arith.constant 33554432 : i32
    %113 = vector.broadcast %c33554432_i32 : i32 to vector<8x128xi32>
    %114 = arith.andi %11, %113 : vector<8x128xi32>
    %c0_i32_22 = arith.constant 0 : i32
    %115 = vector.broadcast %c0_i32_22 : i32 to vector<8x128xi32>
    %116 = arith.cmpi eq, %114, %115 : vector<8x128xi32>
    %117 = arith.andi %110, %116 : vector<8x128xi1>
    %118 = arith.extui %117 : vector<8x128xi1> to vector<8x128xi32>
    %cst_23 = arith.constant dense<0> : vector<8xi32>
    %119 = vector.multi_reduction <add>, %118, %cst_23 [1] : vector<8x128xi32> to vector<8xi32>
    %120 = vector.shape_cast %119 : vector<8xi32> to vector<8x1xi32>
    %121 = arith.cmpi sle, %112, %120 : vector<8x1xi32>
    %cst_24 = arith.constant dense<true> : vector<8x1xi1>
    %122 = arith.xori %121, %cst_24 : vector<8x1xi1>
    %123 = vector.broadcast %122 : vector<8x1xi1> to vector<8x128xi1>
    %124 = arith.andi %117, %123 : vector<8x128xi1>
    %125 = arith.ori %105, %124 : vector<8x128xi1>
    %126 = vector.broadcast %121 : vector<8x1xi1> to vector<8x128xi1>
    %127 = vector.broadcast %126 : vector<8x128xi1> to vector<8x128xi1>
    %128 = arith.xori %116, %127 : vector<8x128xi1>
    %cst_25 = arith.constant dense<true> : vector<8x128xi1>
    %129 = arith.xori %128, %cst_25 : vector<8x128xi1>
    %130 = arith.andi %110, %129 : vector<8x128xi1>
    %131 = arith.subi %112, %120 : vector<8x1xi32>
    %132 = arith.select %121, %112, %131 : vector<8x1xi1>, vector<8x1xi32>
    %c16777216_i32 = arith.constant 16777216 : i32
    %133 = vector.broadcast %c16777216_i32 : i32 to vector<8x128xi32>
    %134 = arith.andi %11, %133 : vector<8x128xi32>
    %c0_i32_26 = arith.constant 0 : i32
    %135 = vector.broadcast %c0_i32_26 : i32 to vector<8x128xi32>
    %136 = arith.cmpi eq, %134, %135 : vector<8x128xi32>
    %137 = arith.andi %130, %136 : vector<8x128xi1>
    %138 = arith.extui %137 : vector<8x128xi1> to vector<8x128xi32>
    %cst_27 = arith.constant dense<0> : vector<8xi32>
    %139 = vector.multi_reduction <add>, %138, %cst_27 [1] : vector<8x128xi32> to vector<8xi32>
    %140 = vector.shape_cast %139 : vector<8xi32> to vector<8x1xi32>
    %141 = arith.cmpi sle, %132, %140 : vector<8x1xi32>
    %cst_28 = arith.constant dense<true> : vector<8x1xi1>
    %142 = arith.xori %141, %cst_28 : vector<8x1xi1>
    %143 = vector.broadcast %142 : vector<8x1xi1> to vector<8x128xi1>
    %144 = arith.andi %137, %143 : vector<8x128xi1>
    %145 = arith.ori %125, %144 : vector<8x128xi1>
    %146 = vector.broadcast %141 : vector<8x1xi1> to vector<8x128xi1>
    %147 = vector.broadcast %146 : vector<8x128xi1> to vector<8x128xi1>
    %148 = arith.xori %136, %147 : vector<8x128xi1>
    %cst_29 = arith.constant dense<true> : vector<8x128xi1>
    %149 = arith.xori %148, %cst_29 : vector<8x128xi1>
    %150 = arith.andi %130, %149 : vector<8x128xi1>
    %151 = arith.subi %132, %140 : vector<8x1xi32>
    %152 = arith.select %141, %132, %151 : vector<8x1xi1>, vector<8x1xi32>
    %c8388608_i32 = arith.constant 8388608 : i32
    %153 = vector.broadcast %c8388608_i32 : i32 to vector<8x128xi32>
    %154 = arith.andi %11, %153 : vector<8x128xi32>
    %c0_i32_30 = arith.constant 0 : i32
    %155 = vector.broadcast %c0_i32_30 : i32 to vector<8x128xi32>
    %156 = arith.cmpi eq, %154, %155 : vector<8x128xi32>
    %157 = arith.andi %150, %156 : vector<8x128xi1>
    %158 = arith.extui %157 : vector<8x128xi1> to vector<8x128xi32>
    %cst_31 = arith.constant dense<0> : vector<8xi32>
    %159 = vector.multi_reduction <add>, %158, %cst_31 [1] : vector<8x128xi32> to vector<8xi32>
    %160 = vector.shape_cast %159 : vector<8xi32> to vector<8x1xi32>
    %161 = arith.cmpi sle, %152, %160 : vector<8x1xi32>
    %cst_32 = arith.constant dense<true> : vector<8x1xi1>
    %162 = arith.xori %161, %cst_32 : vector<8x1xi1>
    %163 = vector.broadcast %162 : vector<8x1xi1> to vector<8x128xi1>
    %164 = arith.andi %157, %163 : vector<8x128xi1>
    %165 = arith.ori %145, %164 : vector<8x128xi1>
    %166 = vector.broadcast %161 : vector<8x1xi1> to vector<8x128xi1>
    %167 = vector.broadcast %166 : vector<8x128xi1> to vector<8x128xi1>
    %168 = arith.xori %156, %167 : vector<8x128xi1>
    %cst_33 = arith.constant dense<true> : vector<8x128xi1>
    %169 = arith.xori %168, %cst_33 : vector<8x128xi1>
    %170 = arith.andi %150, %169 : vector<8x128xi1>
    %171 = arith.subi %152, %160 : vector<8x1xi32>
    %172 = arith.select %161, %152, %171 : vector<8x1xi1>, vector<8x1xi32>
    %c4194304_i32 = arith.constant 4194304 : i32
    %173 = vector.broadcast %c4194304_i32 : i32 to vector<8x128xi32>
    %174 = arith.andi %11, %173 : vector<8x128xi32>
    %c0_i32_34 = arith.constant 0 : i32
    %175 = vector.broadcast %c0_i32_34 : i32 to vector<8x128xi32>
    %176 = arith.cmpi eq, %174, %175 : vector<8x128xi32>
    %177 = arith.andi %170, %176 : vector<8x128xi1>
    %178 = arith.extui %177 : vector<8x128xi1> to vector<8x128xi32>
    %cst_35 = arith.constant dense<0> : vector<8xi32>
    %179 = vector.multi_reduction <add>, %178, %cst_35 [1] : vector<8x128xi32> to vector<8xi32>
    %180 = vector.shape_cast %179 : vector<8xi32> to vector<8x1xi32>
    %181 = arith.cmpi sle, %172, %180 : vector<8x1xi32>
    %cst_36 = arith.constant dense<true> : vector<8x1xi1>
    %182 = arith.xori %181, %cst_36 : vector<8x1xi1>
    %183 = vector.broadcast %182 : vector<8x1xi1> to vector<8x128xi1>
    %184 = arith.andi %177, %183 : vector<8x128xi1>
    %185 = arith.ori %165, %184 : vector<8x128xi1>
    %186 = vector.broadcast %181 : vector<8x1xi1> to vector<8x128xi1>
    %187 = vector.broadcast %186 : vector<8x128xi1> to vector<8x128xi1>
    %188 = arith.xori %176, %187 : vector<8x128xi1>
    %cst_37 = arith.constant dense<true> : vector<8x128xi1>
    %189 = arith.xori %188, %cst_37 : vector<8x128xi1>
    %190 = arith.andi %170, %189 : vector<8x128xi1>
    %191 = arith.subi %172, %180 : vector<8x1xi32>
    %192 = arith.select %181, %172, %191 : vector<8x1xi1>, vector<8x1xi32>
    %c2097152_i32 = arith.constant 2097152 : i32
    %193 = vector.broadcast %c2097152_i32 : i32 to vector<8x128xi32>
    %194 = arith.andi %11, %193 : vector<8x128xi32>
    %c0_i32_38 = arith.constant 0 : i32
    %195 = vector.broadcast %c0_i32_38 : i32 to vector<8x128xi32>
    %196 = arith.cmpi eq, %194, %195 : vector<8x128xi32>
    %197 = arith.andi %190, %196 : vector<8x128xi1>
    %198 = arith.extui %197 : vector<8x128xi1> to vector<8x128xi32>
    %cst_39 = arith.constant dense<0> : vector<8xi32>
    %199 = vector.multi_reduction <add>, %198, %cst_39 [1] : vector<8x128xi32> to vector<8xi32>
    %200 = vector.shape_cast %199 : vector<8xi32> to vector<8x1xi32>
    %201 = arith.cmpi sle, %192, %200 : vector<8x1xi32>
    %cst_40 = arith.constant dense<true> : vector<8x1xi1>
    %202 = arith.xori %201, %cst_40 : vector<8x1xi1>
    %203 = vector.broadcast %202 : vector<8x1xi1> to vector<8x128xi1>
    %204 = arith.andi %197, %203 : vector<8x128xi1>
    %205 = arith.ori %185, %204 : vector<8x128xi1>
    %206 = vector.broadcast %201 : vector<8x1xi1> to vector<8x128xi1>
    %207 = vector.broadcast %206 : vector<8x128xi1> to vector<8x128xi1>
    %208 = arith.xori %196, %207 : vector<8x128xi1>
    %cst_41 = arith.constant dense<true> : vector<8x128xi1>
    %209 = arith.xori %208, %cst_41 : vector<8x128xi1>
    %210 = arith.andi %190, %209 : vector<8x128xi1>
    %211 = arith.subi %192, %200 : vector<8x1xi32>
    %212 = arith.select %201, %192, %211 : vector<8x1xi1>, vector<8x1xi32>
    %c1048576_i32 = arith.constant 1048576 : i32
    %213 = vector.broadcast %c1048576_i32 : i32 to vector<8x128xi32>
    %214 = arith.andi %11, %213 : vector<8x128xi32>
    %c0_i32_42 = arith.constant 0 : i32
    %215 = vector.broadcast %c0_i32_42 : i32 to vector<8x128xi32>
    %216 = arith.cmpi eq, %214, %215 : vector<8x128xi32>
    %217 = arith.andi %210, %216 : vector<8x128xi1>
    %218 = arith.extui %217 : vector<8x128xi1> to vector<8x128xi32>
    %cst_43 = arith.constant dense<0> : vector<8xi32>
    %219 = vector.multi_reduction <add>, %218, %cst_43 [1] : vector<8x128xi32> to vector<8xi32>
    %220 = vector.shape_cast %219 : vector<8xi32> to vector<8x1xi32>
    %221 = arith.cmpi sle, %212, %220 : vector<8x1xi32>
    %cst_44 = arith.constant dense<true> : vector<8x1xi1>
    %222 = arith.xori %221, %cst_44 : vector<8x1xi1>
    %223 = vector.broadcast %222 : vector<8x1xi1> to vector<8x128xi1>
    %224 = arith.andi %217, %223 : vector<8x128xi1>
    %225 = arith.ori %205, %224 : vector<8x128xi1>
    %226 = vector.broadcast %221 : vector<8x1xi1> to vector<8x128xi1>
    %227 = vector.broadcast %226 : vector<8x128xi1> to vector<8x128xi1>
    %228 = arith.xori %216, %227 : vector<8x128xi1>
    %cst_45 = arith.constant dense<true> : vector<8x128xi1>
    %229 = arith.xori %228, %cst_45 : vector<8x128xi1>
    %230 = arith.andi %210, %229 : vector<8x128xi1>
    %231 = arith.subi %212, %220 : vector<8x1xi32>
    %232 = arith.select %221, %212, %231 : vector<8x1xi1>, vector<8x1xi32>
    %c524288_i32 = arith.constant 524288 : i32
    %233 = vector.broadcast %c524288_i32 : i32 to vector<8x128xi32>
    %234 = arith.andi %11, %233 : vector<8x128xi32>
    %c0_i32_46 = arith.constant 0 : i32
    %235 = vector.broadcast %c0_i32_46 : i32 to vector<8x128xi32>
    %236 = arith.cmpi eq, %234, %235 : vector<8x128xi32>
    %237 = arith.andi %230, %236 : vector<8x128xi1>
    %238 = arith.extui %237 : vector<8x128xi1> to vector<8x128xi32>
    %cst_47 = arith.constant dense<0> : vector<8xi32>
    %239 = vector.multi_reduction <add>, %238, %cst_47 [1] : vector<8x128xi32> to vector<8xi32>
    %240 = vector.shape_cast %239 : vector<8xi32> to vector<8x1xi32>
    %241 = arith.cmpi sle, %232, %240 : vector<8x1xi32>
    %cst_48 = arith.constant dense<true> : vector<8x1xi1>
    %242 = arith.xori %241, %cst_48 : vector<8x1xi1>
    %243 = vector.broadcast %242 : vector<8x1xi1> to vector<8x128xi1>
    %244 = arith.andi %237, %243 : vector<8x128xi1>
    %245 = arith.ori %225, %244 : vector<8x128xi1>
    %246 = vector.broadcast %241 : vector<8x1xi1> to vector<8x128xi1>
    %247 = vector.broadcast %246 : vector<8x128xi1> to vector<8x128xi1>
    %248 = arith.xori %236, %247 : vector<8x128xi1>
    %cst_49 = arith.constant dense<true> : vector<8x128xi1>
    %249 = arith.xori %248, %cst_49 : vector<8x128xi1>
    %250 = arith.andi %230, %249 : vector<8x128xi1>
    %251 = arith.subi %232, %240 : vector<8x1xi32>
    %252 = arith.select %241, %232, %251 : vector<8x1xi1>, vector<8x1xi32>
    %c262144_i32 = arith.constant 262144 : i32
    %253 = vector.broadcast %c262144_i32 : i32 to vector<8x128xi32>
    %254 = arith.andi %11, %253 : vector<8x128xi32>
    %c0_i32_50 = arith.constant 0 : i32
    %255 = vector.broadcast %c0_i32_50 : i32 to vector<8x128xi32>
    %256 = arith.cmpi eq, %254, %255 : vector<8x128xi32>
    %257 = arith.andi %250, %256 : vector<8x128xi1>
    %258 = arith.extui %257 : vector<8x128xi1> to vector<8x128xi32>
    %cst_51 = arith.constant dense<0> : vector<8xi32>
    %259 = vector.multi_reduction <add>, %258, %cst_51 [1] : vector<8x128xi32> to vector<8xi32>
    %260 = vector.shape_cast %259 : vector<8xi32> to vector<8x1xi32>
    %261 = arith.cmpi sle, %252, %260 : vector<8x1xi32>
    %cst_52 = arith.constant dense<true> : vector<8x1xi1>
    %262 = arith.xori %261, %cst_52 : vector<8x1xi1>
    %263 = vector.broadcast %262 : vector<8x1xi1> to vector<8x128xi1>
    %264 = arith.andi %257, %263 : vector<8x128xi1>
    %265 = arith.ori %245, %264 : vector<8x128xi1>
    %266 = vector.broadcast %261 : vector<8x1xi1> to vector<8x128xi1>
    %267 = vector.broadcast %266 : vector<8x128xi1> to vector<8x128xi1>
    %268 = arith.xori %256, %267 : vector<8x128xi1>
    %cst_53 = arith.constant dense<true> : vector<8x128xi1>
    %269 = arith.xori %268, %cst_53 : vector<8x128xi1>
    %270 = arith.andi %250, %269 : vector<8x128xi1>
    %271 = arith.subi %252, %260 : vector<8x1xi32>
    %272 = arith.select %261, %252, %271 : vector<8x1xi1>, vector<8x1xi32>
    %c131072_i32 = arith.constant 131072 : i32
    %273 = vector.broadcast %c131072_i32 : i32 to vector<8x128xi32>
    %274 = arith.andi %11, %273 : vector<8x128xi32>
    %c0_i32_54 = arith.constant 0 : i32
    %275 = vector.broadcast %c0_i32_54 : i32 to vector<8x128xi32>
    %276 = arith.cmpi eq, %274, %275 : vector<8x128xi32>
    %277 = arith.andi %270, %276 : vector<8x128xi1>
    %278 = arith.extui %277 : vector<8x128xi1> to vector<8x128xi32>
    %cst_55 = arith.constant dense<0> : vector<8xi32>
    %279 = vector.multi_reduction <add>, %278, %cst_55 [1] : vector<8x128xi32> to vector<8xi32>
    %280 = vector.shape_cast %279 : vector<8xi32> to vector<8x1xi32>
    %281 = arith.cmpi sle, %272, %280 : vector<8x1xi32>
    %cst_56 = arith.constant dense<true> : vector<8x1xi1>
    %282 = arith.xori %281, %cst_56 : vector<8x1xi1>
    %283 = vector.broadcast %282 : vector<8x1xi1> to vector<8x128xi1>
    %284 = arith.andi %277, %283 : vector<8x128xi1>
    %285 = arith.ori %265, %284 : vector<8x128xi1>
    %286 = vector.broadcast %281 : vector<8x1xi1> to vector<8x128xi1>
    %287 = vector.broadcast %286 : vector<8x128xi1> to vector<8x128xi1>
    %288 = arith.xori %276, %287 : vector<8x128xi1>
    %cst_57 = arith.constant dense<true> : vector<8x128xi1>
    %289 = arith.xori %288, %cst_57 : vector<8x128xi1>
    %290 = arith.andi %270, %289 : vector<8x128xi1>
    %291 = arith.subi %272, %280 : vector<8x1xi32>
    %292 = arith.select %281, %272, %291 : vector<8x1xi1>, vector<8x1xi32>
    %c65536_i32 = arith.constant 65536 : i32
    %293 = vector.broadcast %c65536_i32 : i32 to vector<8x128xi32>
    %294 = arith.andi %11, %293 : vector<8x128xi32>
    %c0_i32_58 = arith.constant 0 : i32
    %295 = vector.broadcast %c0_i32_58 : i32 to vector<8x128xi32>
    %296 = arith.cmpi eq, %294, %295 : vector<8x128xi32>
    %297 = arith.andi %290, %296 : vector<8x128xi1>
    %298 = arith.extui %297 : vector<8x128xi1> to vector<8x128xi32>
    %cst_59 = arith.constant dense<0> : vector<8xi32>
    %299 = vector.multi_reduction <add>, %298, %cst_59 [1] : vector<8x128xi32> to vector<8xi32>
    %300 = vector.shape_cast %299 : vector<8xi32> to vector<8x1xi32>
    %301 = arith.cmpi sle, %292, %300 : vector<8x1xi32>
    %cst_60 = arith.constant dense<true> : vector<8x1xi1>
    %302 = arith.xori %301, %cst_60 : vector<8x1xi1>
    %303 = vector.broadcast %302 : vector<8x1xi1> to vector<8x128xi1>
    %304 = arith.andi %297, %303 : vector<8x128xi1>
    %305 = arith.ori %285, %304 : vector<8x128xi1>
    %306 = vector.broadcast %301 : vector<8x1xi1> to vector<8x128xi1>
    %307 = vector.broadcast %306 : vector<8x128xi1> to vector<8x128xi1>
    %308 = arith.xori %296, %307 : vector<8x128xi1>
    %cst_61 = arith.constant dense<true> : vector<8x128xi1>
    %309 = arith.xori %308, %cst_61 : vector<8x128xi1>
    %310 = arith.andi %290, %309 : vector<8x128xi1>
    %311 = arith.subi %292, %300 : vector<8x1xi32>
    %312 = arith.select %301, %292, %311 : vector<8x1xi1>, vector<8x1xi32>
    %c32768_i32 = arith.constant 32768 : i32
    %313 = vector.broadcast %c32768_i32 : i32 to vector<8x128xi32>
    %314 = arith.andi %11, %313 : vector<8x128xi32>
    %c0_i32_62 = arith.constant 0 : i32
    %315 = vector.broadcast %c0_i32_62 : i32 to vector<8x128xi32>
    %316 = arith.cmpi eq, %314, %315 : vector<8x128xi32>
    %317 = arith.andi %310, %316 : vector<8x128xi1>
    %318 = arith.extui %317 : vector<8x128xi1> to vector<8x128xi32>
    %cst_63 = arith.constant dense<0> : vector<8xi32>
    %319 = vector.multi_reduction <add>, %318, %cst_63 [1] : vector<8x128xi32> to vector<8xi32>
    %320 = vector.shape_cast %319 : vector<8xi32> to vector<8x1xi32>
    %321 = arith.cmpi sle, %312, %320 : vector<8x1xi32>
    %cst_64 = arith.constant dense<true> : vector<8x1xi1>
    %322 = arith.xori %321, %cst_64 : vector<8x1xi1>
    %323 = vector.broadcast %322 : vector<8x1xi1> to vector<8x128xi1>
    %324 = arith.andi %317, %323 : vector<8x128xi1>
    %325 = arith.ori %305, %324 : vector<8x128xi1>
    %326 = vector.broadcast %321 : vector<8x1xi1> to vector<8x128xi1>
    %327 = vector.broadcast %326 : vector<8x128xi1> to vector<8x128xi1>
    %328 = arith.xori %316, %327 : vector<8x128xi1>
    %cst_65 = arith.constant dense<true> : vector<8x128xi1>
    %329 = arith.xori %328, %cst_65 : vector<8x128xi1>
    %330 = arith.andi %310, %329 : vector<8x128xi1>
    %331 = arith.subi %312, %320 : vector<8x1xi32>
    %332 = arith.select %321, %312, %331 : vector<8x1xi1>, vector<8x1xi32>
    %c16384_i32 = arith.constant 16384 : i32
    %333 = vector.broadcast %c16384_i32 : i32 to vector<8x128xi32>
    %334 = arith.andi %11, %333 : vector<8x128xi32>
    %c0_i32_66 = arith.constant 0 : i32
    %335 = vector.broadcast %c0_i32_66 : i32 to vector<8x128xi32>
    %336 = arith.cmpi eq, %334, %335 : vector<8x128xi32>
    %337 = arith.andi %330, %336 : vector<8x128xi1>
    %338 = arith.extui %337 : vector<8x128xi1> to vector<8x128xi32>
    %cst_67 = arith.constant dense<0> : vector<8xi32>
    %339 = vector.multi_reduction <add>, %338, %cst_67 [1] : vector<8x128xi32> to vector<8xi32>
    %340 = vector.shape_cast %339 : vector<8xi32> to vector<8x1xi32>
    %341 = arith.cmpi sle, %332, %340 : vector<8x1xi32>
    %cst_68 = arith.constant dense<true> : vector<8x1xi1>
    %342 = arith.xori %341, %cst_68 : vector<8x1xi1>
    %343 = vector.broadcast %342 : vector<8x1xi1> to vector<8x128xi1>
    %344 = arith.andi %337, %343 : vector<8x128xi1>
    %345 = arith.ori %325, %344 : vector<8x128xi1>
    %346 = vector.broadcast %341 : vector<8x1xi1> to vector<8x128xi1>
    %347 = vector.broadcast %346 : vector<8x128xi1> to vector<8x128xi1>
    %348 = arith.xori %336, %347 : vector<8x128xi1>
    %cst_69 = arith.constant dense<true> : vector<8x128xi1>
    %349 = arith.xori %348, %cst_69 : vector<8x128xi1>
    %350 = arith.andi %330, %349 : vector<8x128xi1>
    %351 = arith.subi %332, %340 : vector<8x1xi32>
    %352 = arith.select %341, %332, %351 : vector<8x1xi1>, vector<8x1xi32>
    %c8192_i32 = arith.constant 8192 : i32
    %353 = vector.broadcast %c8192_i32 : i32 to vector<8x128xi32>
    %354 = arith.andi %11, %353 : vector<8x128xi32>
    %c0_i32_70 = arith.constant 0 : i32
    %355 = vector.broadcast %c0_i32_70 : i32 to vector<8x128xi32>
    %356 = arith.cmpi eq, %354, %355 : vector<8x128xi32>
    %357 = arith.andi %350, %356 : vector<8x128xi1>
    %358 = arith.extui %357 : vector<8x128xi1> to vector<8x128xi32>
    %cst_71 = arith.constant dense<0> : vector<8xi32>
    %359 = vector.multi_reduction <add>, %358, %cst_71 [1] : vector<8x128xi32> to vector<8xi32>
    %360 = vector.shape_cast %359 : vector<8xi32> to vector<8x1xi32>
    %361 = arith.cmpi sle, %352, %360 : vector<8x1xi32>
    %cst_72 = arith.constant dense<true> : vector<8x1xi1>
    %362 = arith.xori %361, %cst_72 : vector<8x1xi1>
    %363 = vector.broadcast %362 : vector<8x1xi1> to vector<8x128xi1>
    %364 = arith.andi %357, %363 : vector<8x128xi1>
    %365 = arith.ori %345, %364 : vector<8x128xi1>
    %366 = vector.broadcast %361 : vector<8x1xi1> to vector<8x128xi1>
    %367 = vector.broadcast %366 : vector<8x128xi1> to vector<8x128xi1>
    %368 = arith.xori %356, %367 : vector<8x128xi1>
    %cst_73 = arith.constant dense<true> : vector<8x128xi1>
    %369 = arith.xori %368, %cst_73 : vector<8x128xi1>
    %370 = arith.andi %350, %369 : vector<8x128xi1>
    %371 = arith.subi %352, %360 : vector<8x1xi32>
    %372 = arith.select %361, %352, %371 : vector<8x1xi1>, vector<8x1xi32>
    %c4096_i32 = arith.constant 4096 : i32
    %373 = vector.broadcast %c4096_i32 : i32 to vector<8x128xi32>
    %374 = arith.andi %11, %373 : vector<8x128xi32>
    %c0_i32_74 = arith.constant 0 : i32
    %375 = vector.broadcast %c0_i32_74 : i32 to vector<8x128xi32>
    %376 = arith.cmpi eq, %374, %375 : vector<8x128xi32>
    %377 = arith.andi %370, %376 : vector<8x128xi1>
    %378 = arith.extui %377 : vector<8x128xi1> to vector<8x128xi32>
    %cst_75 = arith.constant dense<0> : vector<8xi32>
    %379 = vector.multi_reduction <add>, %378, %cst_75 [1] : vector<8x128xi32> to vector<8xi32>
    %380 = vector.shape_cast %379 : vector<8xi32> to vector<8x1xi32>
    %381 = arith.cmpi sle, %372, %380 : vector<8x1xi32>
    %cst_76 = arith.constant dense<true> : vector<8x1xi1>
    %382 = arith.xori %381, %cst_76 : vector<8x1xi1>
    %383 = vector.broadcast %382 : vector<8x1xi1> to vector<8x128xi1>
    %384 = arith.andi %377, %383 : vector<8x128xi1>
    %385 = arith.ori %365, %384 : vector<8x128xi1>
    %386 = vector.broadcast %381 : vector<8x1xi1> to vector<8x128xi1>
    %387 = vector.broadcast %386 : vector<8x128xi1> to vector<8x128xi1>
    %388 = arith.xori %376, %387 : vector<8x128xi1>
    %cst_77 = arith.constant dense<true> : vector<8x128xi1>
    %389 = arith.xori %388, %cst_77 : vector<8x128xi1>
    %390 = arith.andi %370, %389 : vector<8x128xi1>
    %391 = arith.subi %372, %380 : vector<8x1xi32>
    %392 = arith.select %381, %372, %391 : vector<8x1xi1>, vector<8x1xi32>
    %c2048_i32 = arith.constant 2048 : i32
    %393 = vector.broadcast %c2048_i32 : i32 to vector<8x128xi32>
    %394 = arith.andi %11, %393 : vector<8x128xi32>
    %c0_i32_78 = arith.constant 0 : i32
    %395 = vector.broadcast %c0_i32_78 : i32 to vector<8x128xi32>
    %396 = arith.cmpi eq, %394, %395 : vector<8x128xi32>
    %397 = arith.andi %390, %396 : vector<8x128xi1>
    %398 = arith.extui %397 : vector<8x128xi1> to vector<8x128xi32>
    %cst_79 = arith.constant dense<0> : vector<8xi32>
    %399 = vector.multi_reduction <add>, %398, %cst_79 [1] : vector<8x128xi32> to vector<8xi32>
    %400 = vector.shape_cast %399 : vector<8xi32> to vector<8x1xi32>
    %401 = arith.cmpi sle, %392, %400 : vector<8x1xi32>
    %cst_80 = arith.constant dense<true> : vector<8x1xi1>
    %402 = arith.xori %401, %cst_80 : vector<8x1xi1>
    %403 = vector.broadcast %402 : vector<8x1xi1> to vector<8x128xi1>
    %404 = arith.andi %397, %403 : vector<8x128xi1>
    %405 = arith.ori %385, %404 : vector<8x128xi1>
    %406 = vector.broadcast %401 : vector<8x1xi1> to vector<8x128xi1>
    %407 = vector.broadcast %406 : vector<8x128xi1> to vector<8x128xi1>
    %408 = arith.xori %396, %407 : vector<8x128xi1>
    %cst_81 = arith.constant dense<true> : vector<8x128xi1>
    %409 = arith.xori %408, %cst_81 : vector<8x128xi1>
    %410 = arith.andi %390, %409 : vector<8x128xi1>
    %411 = arith.subi %392, %400 : vector<8x1xi32>
    %412 = arith.select %401, %392, %411 : vector<8x1xi1>, vector<8x1xi32>
    %c1024_i32 = arith.constant 1024 : i32
    %413 = vector.broadcast %c1024_i32 : i32 to vector<8x128xi32>
    %414 = arith.andi %11, %413 : vector<8x128xi32>
    %c0_i32_82 = arith.constant 0 : i32
    %415 = vector.broadcast %c0_i32_82 : i32 to vector<8x128xi32>
    %416 = arith.cmpi eq, %414, %415 : vector<8x128xi32>
    %417 = arith.andi %410, %416 : vector<8x128xi1>
    %418 = arith.extui %417 : vector<8x128xi1> to vector<8x128xi32>
    %cst_83 = arith.constant dense<0> : vector<8xi32>
    %419 = vector.multi_reduction <add>, %418, %cst_83 [1] : vector<8x128xi32> to vector<8xi32>
    %420 = vector.shape_cast %419 : vector<8xi32> to vector<8x1xi32>
    %421 = arith.cmpi sle, %412, %420 : vector<8x1xi32>
    %cst_84 = arith.constant dense<true> : vector<8x1xi1>
    %422 = arith.xori %421, %cst_84 : vector<8x1xi1>
    %423 = vector.broadcast %422 : vector<8x1xi1> to vector<8x128xi1>
    %424 = arith.andi %417, %423 : vector<8x128xi1>
    %425 = arith.ori %405, %424 : vector<8x128xi1>
    %426 = vector.broadcast %421 : vector<8x1xi1> to vector<8x128xi1>
    %427 = vector.broadcast %426 : vector<8x128xi1> to vector<8x128xi1>
    %428 = arith.xori %416, %427 : vector<8x128xi1>
    %cst_85 = arith.constant dense<true> : vector<8x128xi1>
    %429 = arith.xori %428, %cst_85 : vector<8x128xi1>
    %430 = arith.andi %410, %429 : vector<8x128xi1>
    %431 = arith.subi %412, %420 : vector<8x1xi32>
    %432 = arith.select %421, %412, %431 : vector<8x1xi1>, vector<8x1xi32>
    %c512_i32 = arith.constant 512 : i32
    %433 = vector.broadcast %c512_i32 : i32 to vector<8x128xi32>
    %434 = arith.andi %11, %433 : vector<8x128xi32>
    %c0_i32_86 = arith.constant 0 : i32
    %435 = vector.broadcast %c0_i32_86 : i32 to vector<8x128xi32>
    %436 = arith.cmpi eq, %434, %435 : vector<8x128xi32>
    %437 = arith.andi %430, %436 : vector<8x128xi1>
    %438 = arith.extui %437 : vector<8x128xi1> to vector<8x128xi32>
    %cst_87 = arith.constant dense<0> : vector<8xi32>
    %439 = vector.multi_reduction <add>, %438, %cst_87 [1] : vector<8x128xi32> to vector<8xi32>
    %440 = vector.shape_cast %439 : vector<8xi32> to vector<8x1xi32>
    %441 = arith.cmpi sle, %432, %440 : vector<8x1xi32>
    %cst_88 = arith.constant dense<true> : vector<8x1xi1>
    %442 = arith.xori %441, %cst_88 : vector<8x1xi1>
    %443 = vector.broadcast %442 : vector<8x1xi1> to vector<8x128xi1>
    %444 = arith.andi %437, %443 : vector<8x128xi1>
    %445 = arith.ori %425, %444 : vector<8x128xi1>
    %446 = vector.broadcast %441 : vector<8x1xi1> to vector<8x128xi1>
    %447 = vector.broadcast %446 : vector<8x128xi1> to vector<8x128xi1>
    %448 = arith.xori %436, %447 : vector<8x128xi1>
    %cst_89 = arith.constant dense<true> : vector<8x128xi1>
    %449 = arith.xori %448, %cst_89 : vector<8x128xi1>
    %450 = arith.andi %430, %449 : vector<8x128xi1>
    %451 = arith.subi %432, %440 : vector<8x1xi32>
    %452 = arith.select %441, %432, %451 : vector<8x1xi1>, vector<8x1xi32>
    %c256_i32 = arith.constant 256 : i32
    %453 = vector.broadcast %c256_i32 : i32 to vector<8x128xi32>
    %454 = arith.andi %11, %453 : vector<8x128xi32>
    %c0_i32_90 = arith.constant 0 : i32
    %455 = vector.broadcast %c0_i32_90 : i32 to vector<8x128xi32>
    %456 = arith.cmpi eq, %454, %455 : vector<8x128xi32>
    %457 = arith.andi %450, %456 : vector<8x128xi1>
    %458 = arith.extui %457 : vector<8x128xi1> to vector<8x128xi32>
    %cst_91 = arith.constant dense<0> : vector<8xi32>
    %459 = vector.multi_reduction <add>, %458, %cst_91 [1] : vector<8x128xi32> to vector<8xi32>
    %460 = vector.shape_cast %459 : vector<8xi32> to vector<8x1xi32>
    %461 = arith.cmpi sle, %452, %460 : vector<8x1xi32>
    %cst_92 = arith.constant dense<true> : vector<8x1xi1>
    %462 = arith.xori %461, %cst_92 : vector<8x1xi1>
    %463 = vector.broadcast %462 : vector<8x1xi1> to vector<8x128xi1>
    %464 = arith.andi %457, %463 : vector<8x128xi1>
    %465 = arith.ori %445, %464 : vector<8x128xi1>
    %466 = vector.broadcast %461 : vector<8x1xi1> to vector<8x128xi1>
    %467 = vector.broadcast %466 : vector<8x128xi1> to vector<8x128xi1>
    %468 = arith.xori %456, %467 : vector<8x128xi1>
    %cst_93 = arith.constant dense<true> : vector<8x128xi1>
    %469 = arith.xori %468, %cst_93 : vector<8x128xi1>
    %470 = arith.andi %450, %469 : vector<8x128xi1>
    %471 = arith.subi %452, %460 : vector<8x1xi32>
    %472 = arith.select %461, %452, %471 : vector<8x1xi1>, vector<8x1xi32>
    %c128_i32 = arith.constant 128 : i32
    %473 = vector.broadcast %c128_i32 : i32 to vector<8x128xi32>
    %474 = arith.andi %11, %473 : vector<8x128xi32>
    %c0_i32_94 = arith.constant 0 : i32
    %475 = vector.broadcast %c0_i32_94 : i32 to vector<8x128xi32>
    %476 = arith.cmpi eq, %474, %475 : vector<8x128xi32>
    %477 = arith.andi %470, %476 : vector<8x128xi1>
    %478 = arith.extui %477 : vector<8x128xi1> to vector<8x128xi32>
    %cst_95 = arith.constant dense<0> : vector<8xi32>
    %479 = vector.multi_reduction <add>, %478, %cst_95 [1] : vector<8x128xi32> to vector<8xi32>
    %480 = vector.shape_cast %479 : vector<8xi32> to vector<8x1xi32>
    %481 = arith.cmpi sle, %472, %480 : vector<8x1xi32>
    %cst_96 = arith.constant dense<true> : vector<8x1xi1>
    %482 = arith.xori %481, %cst_96 : vector<8x1xi1>
    %483 = vector.broadcast %482 : vector<8x1xi1> to vector<8x128xi1>
    %484 = arith.andi %477, %483 : vector<8x128xi1>
    %485 = arith.ori %465, %484 : vector<8x128xi1>
    %486 = vector.broadcast %481 : vector<8x1xi1> to vector<8x128xi1>
    %487 = vector.broadcast %486 : vector<8x128xi1> to vector<8x128xi1>
    %488 = arith.xori %476, %487 : vector<8x128xi1>
    %cst_97 = arith.constant dense<true> : vector<8x128xi1>
    %489 = arith.xori %488, %cst_97 : vector<8x128xi1>
    %490 = arith.andi %470, %489 : vector<8x128xi1>
    %491 = arith.subi %472, %480 : vector<8x1xi32>
    %492 = arith.select %481, %472, %491 : vector<8x1xi1>, vector<8x1xi32>
    %c64_i32 = arith.constant 64 : i32
    %493 = vector.broadcast %c64_i32 : i32 to vector<8x128xi32>
    %494 = arith.andi %11, %493 : vector<8x128xi32>
    %c0_i32_98 = arith.constant 0 : i32
    %495 = vector.broadcast %c0_i32_98 : i32 to vector<8x128xi32>
    %496 = arith.cmpi eq, %494, %495 : vector<8x128xi32>
    %497 = arith.andi %490, %496 : vector<8x128xi1>
    %498 = arith.extui %497 : vector<8x128xi1> to vector<8x128xi32>
    %cst_99 = arith.constant dense<0> : vector<8xi32>
    %499 = vector.multi_reduction <add>, %498, %cst_99 [1] : vector<8x128xi32> to vector<8xi32>
    %500 = vector.shape_cast %499 : vector<8xi32> to vector<8x1xi32>
    %501 = arith.cmpi sle, %492, %500 : vector<8x1xi32>
    %cst_100 = arith.constant dense<true> : vector<8x1xi1>
    %502 = arith.xori %501, %cst_100 : vector<8x1xi1>
    %503 = vector.broadcast %502 : vector<8x1xi1> to vector<8x128xi1>
    %504 = arith.andi %497, %503 : vector<8x128xi1>
    %505 = arith.ori %485, %504 : vector<8x128xi1>
    %506 = vector.broadcast %501 : vector<8x1xi1> to vector<8x128xi1>
    %507 = vector.broadcast %506 : vector<8x128xi1> to vector<8x128xi1>
    %508 = arith.xori %496, %507 : vector<8x128xi1>
    %cst_101 = arith.constant dense<true> : vector<8x128xi1>
    %509 = arith.xori %508, %cst_101 : vector<8x128xi1>
    %510 = arith.andi %490, %509 : vector<8x128xi1>
    %511 = arith.subi %492, %500 : vector<8x1xi32>
    %512 = arith.select %501, %492, %511 : vector<8x1xi1>, vector<8x1xi32>
    %c32_i32 = arith.constant 32 : i32
    %513 = vector.broadcast %c32_i32 : i32 to vector<8x128xi32>
    %514 = arith.andi %11, %513 : vector<8x128xi32>
    %c0_i32_102 = arith.constant 0 : i32
    %515 = vector.broadcast %c0_i32_102 : i32 to vector<8x128xi32>
    %516 = arith.cmpi eq, %514, %515 : vector<8x128xi32>
    %517 = arith.andi %510, %516 : vector<8x128xi1>
    %518 = arith.extui %517 : vector<8x128xi1> to vector<8x128xi32>
    %cst_103 = arith.constant dense<0> : vector<8xi32>
    %519 = vector.multi_reduction <add>, %518, %cst_103 [1] : vector<8x128xi32> to vector<8xi32>
    %520 = vector.shape_cast %519 : vector<8xi32> to vector<8x1xi32>
    %521 = arith.cmpi sle, %512, %520 : vector<8x1xi32>
    %cst_104 = arith.constant dense<true> : vector<8x1xi1>
    %522 = arith.xori %521, %cst_104 : vector<8x1xi1>
    %523 = vector.broadcast %522 : vector<8x1xi1> to vector<8x128xi1>
    %524 = arith.andi %517, %523 : vector<8x128xi1>
    %525 = arith.ori %505, %524 : vector<8x128xi1>
    %526 = vector.broadcast %521 : vector<8x1xi1> to vector<8x128xi1>
    %527 = vector.broadcast %526 : vector<8x128xi1> to vector<8x128xi1>
    %528 = arith.xori %516, %527 : vector<8x128xi1>
    %cst_105 = arith.constant dense<true> : vector<8x128xi1>
    %529 = arith.xori %528, %cst_105 : vector<8x128xi1>
    %530 = arith.andi %510, %529 : vector<8x128xi1>
    %531 = arith.subi %512, %520 : vector<8x1xi32>
    %532 = arith.select %521, %512, %531 : vector<8x1xi1>, vector<8x1xi32>
    %c16_i32 = arith.constant 16 : i32
    %533 = vector.broadcast %c16_i32 : i32 to vector<8x128xi32>
    %534 = arith.andi %11, %533 : vector<8x128xi32>
    %c0_i32_106 = arith.constant 0 : i32
    %535 = vector.broadcast %c0_i32_106 : i32 to vector<8x128xi32>
    %536 = arith.cmpi eq, %534, %535 : vector<8x128xi32>
    %537 = arith.andi %530, %536 : vector<8x128xi1>
    %538 = arith.extui %537 : vector<8x128xi1> to vector<8x128xi32>
    %cst_107 = arith.constant dense<0> : vector<8xi32>
    %539 = vector.multi_reduction <add>, %538, %cst_107 [1] : vector<8x128xi32> to vector<8xi32>
    %540 = vector.shape_cast %539 : vector<8xi32> to vector<8x1xi32>
    %541 = arith.cmpi sle, %532, %540 : vector<8x1xi32>
    %cst_108 = arith.constant dense<true> : vector<8x1xi1>
    %542 = arith.xori %541, %cst_108 : vector<8x1xi1>
    %543 = vector.broadcast %542 : vector<8x1xi1> to vector<8x128xi1>
    %544 = arith.andi %537, %543 : vector<8x128xi1>
    %545 = arith.ori %525, %544 : vector<8x128xi1>
    %546 = vector.broadcast %541 : vector<8x1xi1> to vector<8x128xi1>
    %547 = vector.broadcast %546 : vector<8x128xi1> to vector<8x128xi1>
    %548 = arith.xori %536, %547 : vector<8x128xi1>
    %cst_109 = arith.constant dense<true> : vector<8x128xi1>
    %549 = arith.xori %548, %cst_109 : vector<8x128xi1>
    %550 = arith.andi %530, %549 : vector<8x128xi1>
    %551 = arith.subi %532, %540 : vector<8x1xi32>
    %552 = arith.select %541, %532, %551 : vector<8x1xi1>, vector<8x1xi32>
    %c8_i32 = arith.constant 8 : i32
    %553 = vector.broadcast %c8_i32 : i32 to vector<8x128xi32>
    %554 = arith.andi %11, %553 : vector<8x128xi32>
    %c0_i32_110 = arith.constant 0 : i32
    %555 = vector.broadcast %c0_i32_110 : i32 to vector<8x128xi32>
    %556 = arith.cmpi eq, %554, %555 : vector<8x128xi32>
    %557 = arith.andi %550, %556 : vector<8x128xi1>
    %558 = arith.extui %557 : vector<8x128xi1> to vector<8x128xi32>
    %cst_111 = arith.constant dense<0> : vector<8xi32>
    %559 = vector.multi_reduction <add>, %558, %cst_111 [1] : vector<8x128xi32> to vector<8xi32>
    %560 = vector.shape_cast %559 : vector<8xi32> to vector<8x1xi32>
    %561 = arith.cmpi sle, %552, %560 : vector<8x1xi32>
    %cst_112 = arith.constant dense<true> : vector<8x1xi1>
    %562 = arith.xori %561, %cst_112 : vector<8x1xi1>
    %563 = vector.broadcast %562 : vector<8x1xi1> to vector<8x128xi1>
    %564 = arith.andi %557, %563 : vector<8x128xi1>
    %565 = arith.ori %545, %564 : vector<8x128xi1>
    %566 = vector.broadcast %561 : vector<8x1xi1> to vector<8x128xi1>
    %567 = vector.broadcast %566 : vector<8x128xi1> to vector<8x128xi1>
    %568 = arith.xori %556, %567 : vector<8x128xi1>
    %cst_113 = arith.constant dense<true> : vector<8x128xi1>
    %569 = arith.xori %568, %cst_113 : vector<8x128xi1>
    %570 = arith.andi %550, %569 : vector<8x128xi1>
    %571 = arith.subi %552, %560 : vector<8x1xi32>
    %572 = arith.select %561, %552, %571 : vector<8x1xi1>, vector<8x1xi32>
    %c4_i32 = arith.constant 4 : i32
    %573 = vector.broadcast %c4_i32 : i32 to vector<8x128xi32>
    %574 = arith.andi %11, %573 : vector<8x128xi32>
    %c0_i32_114 = arith.constant 0 : i32
    %575 = vector.broadcast %c0_i32_114 : i32 to vector<8x128xi32>
    %576 = arith.cmpi eq, %574, %575 : vector<8x128xi32>
    %577 = arith.andi %570, %576 : vector<8x128xi1>
    %578 = arith.extui %577 : vector<8x128xi1> to vector<8x128xi32>
    %cst_115 = arith.constant dense<0> : vector<8xi32>
    %579 = vector.multi_reduction <add>, %578, %cst_115 [1] : vector<8x128xi32> to vector<8xi32>
    %580 = vector.shape_cast %579 : vector<8xi32> to vector<8x1xi32>
    %581 = arith.cmpi sle, %572, %580 : vector<8x1xi32>
    %cst_116 = arith.constant dense<true> : vector<8x1xi1>
    %582 = arith.xori %581, %cst_116 : vector<8x1xi1>
    %583 = vector.broadcast %582 : vector<8x1xi1> to vector<8x128xi1>
    %584 = arith.andi %577, %583 : vector<8x128xi1>
    %585 = arith.ori %565, %584 : vector<8x128xi1>
    %586 = vector.broadcast %581 : vector<8x1xi1> to vector<8x128xi1>
    %587 = vector.broadcast %586 : vector<8x128xi1> to vector<8x128xi1>
    %588 = arith.xori %576, %587 : vector<8x128xi1>
    %cst_117 = arith.constant dense<true> : vector<8x128xi1>
    %589 = arith.xori %588, %cst_117 : vector<8x128xi1>
    %590 = arith.andi %570, %589 : vector<8x128xi1>
    %591 = arith.subi %572, %580 : vector<8x1xi32>
    %592 = arith.select %581, %572, %591 : vector<8x1xi1>, vector<8x1xi32>
    %c2_i32 = arith.constant 2 : i32
    %593 = vector.broadcast %c2_i32 : i32 to vector<8x128xi32>
    %594 = arith.andi %11, %593 : vector<8x128xi32>
    %c0_i32_118 = arith.constant 0 : i32
    %595 = vector.broadcast %c0_i32_118 : i32 to vector<8x128xi32>
    %596 = arith.cmpi eq, %594, %595 : vector<8x128xi32>
    %597 = arith.andi %590, %596 : vector<8x128xi1>
    %598 = arith.extui %597 : vector<8x128xi1> to vector<8x128xi32>
    %cst_119 = arith.constant dense<0> : vector<8xi32>
    %599 = vector.multi_reduction <add>, %598, %cst_119 [1] : vector<8x128xi32> to vector<8xi32>
    %600 = vector.shape_cast %599 : vector<8xi32> to vector<8x1xi32>
    %601 = arith.cmpi sle, %592, %600 : vector<8x1xi32>
    %cst_120 = arith.constant dense<true> : vector<8x1xi1>
    %602 = arith.xori %601, %cst_120 : vector<8x1xi1>
    %603 = vector.broadcast %602 : vector<8x1xi1> to vector<8x128xi1>
    %604 = arith.andi %597, %603 : vector<8x128xi1>
    %605 = arith.ori %585, %604 : vector<8x128xi1>
    %606 = vector.broadcast %601 : vector<8x1xi1> to vector<8x128xi1>
    %607 = vector.broadcast %606 : vector<8x128xi1> to vector<8x128xi1>
    %608 = arith.xori %596, %607 : vector<8x128xi1>
    %cst_121 = arith.constant dense<true> : vector<8x128xi1>
    %609 = arith.xori %608, %cst_121 : vector<8x128xi1>
    %610 = arith.andi %590, %609 : vector<8x128xi1>
    %611 = arith.subi %592, %600 : vector<8x1xi32>
    %612 = arith.select %601, %592, %611 : vector<8x1xi1>, vector<8x1xi32>
    %c1_i32_122 = arith.constant 1 : i32
    %613 = vector.broadcast %c1_i32_122 : i32 to vector<8x128xi32>
    %614 = arith.andi %11, %613 : vector<8x128xi32>
    %c0_i32_123 = arith.constant 0 : i32
    %615 = vector.broadcast %c0_i32_123 : i32 to vector<8x128xi32>
    %616 = arith.cmpi eq, %614, %615 : vector<8x128xi32>
    %617 = arith.andi %610, %616 : vector<8x128xi1>
    %618 = arith.extui %617 : vector<8x128xi1> to vector<8x128xi32>
    %cst_124 = arith.constant dense<0> : vector<8xi32>
    %619 = vector.multi_reduction <add>, %618, %cst_124 [1] : vector<8x128xi32> to vector<8xi32>
    %620 = vector.shape_cast %619 : vector<8xi32> to vector<8x1xi32>
    %621 = arith.cmpi sle, %612, %620 : vector<8x1xi32>
    %cst_125 = arith.constant dense<true> : vector<8x1xi1>
    %622 = arith.xori %621, %cst_125 : vector<8x1xi1>
    %623 = vector.broadcast %622 : vector<8x1xi1> to vector<8x128xi1>
    %624 = arith.andi %617, %623 : vector<8x128xi1>
    %625 = arith.ori %605, %624 : vector<8x128xi1>
    %626 = vector.broadcast %621 : vector<8x1xi1> to vector<8x128xi1>
    %627 = vector.broadcast %626 : vector<8x128xi1> to vector<8x128xi1>
    %628 = arith.xori %616, %627 : vector<8x128xi1>
    %cst_126 = arith.constant dense<true> : vector<8x128xi1>
    %629 = arith.xori %628, %cst_126 : vector<8x128xi1>
    %630 = arith.andi %610, %629 : vector<8x128xi1>
    %631 = arith.ori %625, %630 : vector<8x128xi1>
    %632 = arith.extui %631 : vector<8x128xi1> to vector<8x128xi32>
    %c0_127 = arith.constant 0 : index
    %c0_128 = arith.constant 0 : index
    %633 = vector.load %arg5[%c0_127, %c0_128] : memref<8x128xi32, #tpu.memory_space<vmem>>, vector<8x128xi32>
    tpu.vector_store %arg5[%c0_127, %c0_128], %632 {strides = array<i32>} : memref<8x128xi32, #tpu.memory_space<vmem>>, vector<8x128xi32>,
    %c0_129 = arith.constant 0 : index
    %c0_130 = arith.constant 0 : index
    %634 = vector.load %arg3[%c0_129, %c0_130] : memref<8x128xi32, #tpu.memory_space<vmem>>, vector<8x128xi32>
    %c103_i32 = arith.constant 103 : i32
    %635 = vector.broadcast %c103_i32 : i32 to vector<8x128xi32>
    %636 = arith.select %631, %635, %634 : vector<8x128xi1>, vector<8x128xi32>
    %c0_131 = arith.constant 0 : index
    %c0_132 = arith.constant 0 : index
    %637 = vector.load %arg4[%c0_131, %c0_132] : memref<8x128xi32, #tpu.memory_space<vmem>>, vector<8x128xi32>
    tpu.vector_store %arg4[%c0_131, %c0_132], %636 {strides = array<i32>} : memref<8x128xi32, #tpu.memory_space<vmem>>, vector<8x128xi32>,
    return
  }
  func.func @transform_0(%arg0: i32) -> (i32, i32) {
    %c0_i32 = arith.constant 0 : i32
    %c0_i32_0 = arith.constant 0 : i32
    return %arg0, %c0_i32 : i32, i32
  }
  func.func @transform_1(%arg0: i32) -> (i32, i32) {
    %c0_i32 = arith.constant 0 : i32
    %c0_i32_0 = arith.constant 0 : i32
    return %arg0, %c0_i32 : i32, i32
  }
  func.func @transform_2(%arg0: i32) -> (i32, i32) {
    %c0_i32 = arith.constant 0 : i32
    %c0_i32_0 = arith.constant 0 : i32
    return %arg0, %c0_i32 : i32, i32
  }
  func.func @transform_3(%arg0: i32) -> (i32, i32) {
    %c0_i32 = arith.constant 0 : i32
    %c0_i32_0 = arith.constant 0 : i32
    return %arg0, %c0_i32 : i32, i32
  }
  func.func @transform_4(%arg0: i32) -> (i32, i32) {
    %c0_i32 = arith.constant 0 : i32
    %c0_i32_0 = arith.constant 0 : i32
    return %arg0, %c0_i32 : i32, i32
  }
}

</mosaic_0001>

<llo_original>
// kernel: text_masking_transform_batch.1
$region0: #{text_masking_transform_batch.1}
  #allocation0 [shape = 'u32[]', space=smem, size = 0x4, offset = 0x4, fixed_abs, tag = 'smem constant byte address 0x4 - core index']
  #allocation1 [shape = 'u32[144,128]{1,0:T(1,128)}', space=vmem, size = 0x12000, scoped, tag = 'internal scratch']
  %s0 = inlined_call_operand.vmem [shape: s32[16,2], index: 0, kind: input, shape index: {}]
  %s1 = inlined_call_operand.vmem [shape: s32[16,128], index: 1, kind: input, shape index: {}]
  %s2 = inlined_call_operand.vmem [shape: s32[16,128], index: 2, kind: input, shape index: {}, may-alias: {2,3}]
  %s3 = inlined_call_operand.vmem [shape: s32[16,128], index: 3, kind: output, shape index: {0}, may-alias: {2,3}]
  %s4 = inlined_call_operand.vmem [shape: s32[16,128], index: 4, kind: output, shape index: {1}]
  %5 = xla_tuple %s3, %s4
  %s6 = sld [smem:[#allocation0]]
  $region53: #{text_masking_transform_batch.1} parent=0
    _
  %s8 = ssub.s32 1, %s6
  %s9 = scalar_select 0, %s8, %s6
  loop: start=0, step=1, limit=4
  $region2: #{text_masking_transform_batch.1} parent=0 // loop_pre_header
    _
  $region3: #{text_masking_transform_batch.1} parent=0 // loop_header
    %s11 = sphi 0, %s15
    %p12 = scmp.ge.s32.totalorder %s11, 4
    %s21 = sphi 0, %s23
    %s24 = sphi 0, %s21
    %s25 = sphi 0, %s24
    %s41 = sphi 0, %s25
    %s47 = sphi 0, %s49
    %s50 = sphi 0, %s47
    %s51 = sphi 0, %s50
    %s67 = sphi 0, %s51
    %s73 = sphi 0, %s75
    %s76 = sphi 0, %s73
    %s77 = sphi 0, %s76
    %s93 = sphi 0, %s77
    %s99 = sphi 0, %s101
    %s102 = sphi 0, %s99
    %s103 = sphi 0, %s102
    %s119 = sphi 0, %s103
    %s125 = sphi 0, %s127
    %s128 = sphi 0, %s125
    %s129 = sphi 0, %s128
    %s145 = sphi 0, %s129
  $region4: #{text_masking_transform_batch.1} parent=0 // loop_header_branch
    %14 = sbr.rel (%p12) target = $region8
  $region5: #{text_masking_transform_batch.1} parent=0 // loop_body
    %s16 = ssub.s32 %s11, 1
    %s17 = ssub.s32 %s11, 2
    %s18 = sadd.s32 %s11, 1
    %s19 = ssub.s32 %s11, %s18
    %p20 = scmp.eq.s32.totalorder %s19, 0
    %s22 = sadd.s32 %s21, 1
    %s23 = scalar_select %p20, %s21, %s22
    %p26 = pneg %p20
    %p27 = scmp.eq.s32.totalorder %s11, 1
    %p28 = por %p26, %p27
    %p29 = scmp.ne.s32.totalorder %s21, %s24
    %p30 = scmp.eq.s32.totalorder %s11, 0
    %p31 = por %p29, %p30
    %p32 = scmp.ne.s32.totalorder %s21, %s24
    %p33 = scmp.eq.s32.totalorder %s16, 1
    %p34 = por %p32, %p33
    %p35 = scmp.ne.s32.totalorder %s24, %s25
    %p36 = scmp.eq.s32.totalorder %s16, 0
    %p37 = por %p35, %p36
    %p38 = scmp.ne.s32.totalorder %s24, %s25
    %p39 = scmp.eq.s32.totalorder %s17, 1
    %p40 = por %p38, %p39
    %p42 = scmp.ne.s32.totalorder %s25, %s41
    %p43 = scmp.eq.s32.totalorder %s17, 0
    %p44 = por %p42, %p43
    %s45 = ssub.s32 %s11, %s18
    %p46 = scmp.eq.s32.totalorder %s45, 0
    %s48 = sadd.s32 %s47, 1
    %s49 = scalar_select %p46, %s47, %s48
    %p52 = pneg %p46
    %p53 = scmp.eq.s32.totalorder %s11, 1
    %p54 = por %p52, %p53
    %p55 = scmp.ne.s32.totalorder %s47, %s50
    %p56 = scmp.eq.s32.totalorder %s11, 0
    %p57 = por %p55, %p56
    %p58 = scmp.ne.s32.totalorder %s47, %s50
    %p59 = scmp.eq.s32.totalorder %s16, 1
    %p60 = por %p58, %p59
    %p61 = scmp.ne.s32.totalorder %s50, %s51
    %p62 = scmp.eq.s32.totalorder %s16, 0
    %p63 = por %p61, %p62
    %p64 = scmp.ne.s32.totalorder %s50, %s51
    %p65 = scmp.eq.s32.totalorder %s17, 1
    %p66 = por %p64, %p65
    %p68 = scmp.ne.s32.totalorder %s51, %s67
    %p69 = scmp.eq.s32.totalorder %s17, 0
    %p70 = por %p68, %p69
    %s71 = ssub.s32 %s11, %s18
    %p72 = scmp.eq.s32.totalorder %s71, 0
    %s74 = sadd.s32 %s73, 1
    %s75 = scalar_select %p72, %s73, %s74
    %p78 = pneg %p72
    %p79 = scmp.eq.s32.totalorder %s11, 1
    %p80 = por %p78, %p79
    %p81 = scmp.ne.s32.totalorder %s73, %s76
    %p82 = scmp.eq.s32.totalorder %s11, 0
    %p83 = por %p81, %p82
    %p84 = scmp.ne.s32.totalorder %s73, %s76
    %p85 = scmp.eq.s32.totalorder %s16, 1
    %p86 = por %p84, %p85
    %p87 = scmp.ne.s32.totalorder %s76, %s77
    %p88 = scmp.eq.s32.totalorder %s16, 0
    %p89 = por %p87, %p88
    %p90 = scmp.ne.s32.totalorder %s76, %s77
    %p91 = scmp.eq.s32.totalorder %s17, 1
    %p92 = por %p90, %p91
    %p94 = scmp.ne.s32.totalorder %s77, %s93
    %p95 = scmp.eq.s32.totalorder %s17, 0
    %p96 = por %p94, %p95
    %s97 = ssub.s32 %s11, %s18
    %p98 = scmp.eq.s32.totalorder %s97, 0
    %s100 = sadd.s32 %s99, 1
    %s101 = scalar_select %p98, %s99, %s100
    %p104 = pneg %p98
    %p105 = scmp.eq.s32.totalorder %s11, 1
    %p106 = por %p104, %p105
    %p107 = scmp.ne.s32.totalorder %s99, %s102
    %p108 = scmp.eq.s32.totalorder %s11, 0
    %p109 = por %p107, %p108
    %p110 = scmp.ne.s32.totalorder %s99, %s102
    %p111 = scmp.eq.s32.totalorder %s16, 1
    %p112 = por %p110, %p111
    %p113 = scmp.ne.s32.totalorder %s102, %s103
    %p114 = scmp.eq.s32.totalorder %s16, 0
    %p115 = por %p113, %p114
    %p116 = scmp.ne.s32.totalorder %s102, %s103
    %p117 = scmp.eq.s32.totalorder %s17, 1
    %p118 = por %p116, %p117
    %p120 = scmp.ne.s32.totalorder %s103, %s119
    %p121 = scmp.eq.s32.totalorder %s17, 0
    %p122 = por %p120, %p121
    %s123 = ssub.s32 %s11, %s18
    %p124 = scmp.eq.s32.totalorder %s123, 0
    %s126 = sadd.s32 %s125, 1
    %s127 = scalar_select %p124, %s125, %s126
    %p130 = pneg %p124
    %p131 = scmp.eq.s32.totalorder %s11, 1
    %p132 = por %p130, %p131
    %p133 = scmp.ne.s32.totalorder %s125, %s128
    %p134 = scmp.eq.s32.totalorder %s11, 0
    %p135 = por %p133, %p134
    %p136 = scmp.ne.s32.totalorder %s125, %s128
    %p137 = scmp.eq.s32.totalorder %s16, 1
    %p138 = por %p136, %p137
    %p139 = scmp.ne.s32.totalorder %s128, %s129
    %p140 = scmp.eq.s32.totalorder %s16, 0
    %p141 = por %p139, %p140
    %p142 = scmp.ne.s32.totalorder %s128, %s129
    %p143 = scmp.eq.s32.totalorder %s17, 1
    %p144 = por %p142, %p143
    %p146 = scmp.ne.s32.totalorder %s129, %s145
    %p147 = scmp.eq.s32.totalorder %s17, 0
    %p148 = por %p146, %p147
    %p149 = scmp.le.s32.totalorder 1, %s11
    %p150 = scmp.lt.s32.totalorder %s11, 3
    %p151 = pnand %p149, %p150
    %p152 = pneg %p151
    // Predicated region
    $region9: #{text_masking_transform_batch.1} parent=5 // pred_check
      _
    $region10: #{text_masking_transform_batch.1} parent=5 // pred_check_branch
      %154 = sbr.rel (%p151) target = $region12
    $region11: #{text_masking_transform_batch.1} parent=5 // pred_region
      %s155 = ssub.s32 %s11, 1
    $region12: #{text_masking_transform_batch.1} parent=5 // pred_fallthru
      _
    %p156 = scmp.lt.s32.totalorder %s11, 2
    // Predicated region
    $region13: #{text_masking_transform_batch.1} parent=5 // pred_check
      %p157 = pneg %p156
    $region14: #{text_masking_transform_batch.1} parent=5 // pred_check_branch
      %159 = sbr.rel (%p157) target = $region16
    $region15: #{text_masking_transform_batch.1} parent=5 // pred_region
      // Predicated region
      $region17: #{text_masking_transform_batch.1} parent=15 // pred_check
        %p160 = pneg %p31
      $region18: #{text_masking_transform_batch.1} parent=15 // pred_check_branch
        %162 = sbr.rel (%p160) target = $region20
      $region19: #{text_masking_transform_batch.1} parent=15 // pred_region
        %p163 = scmp.lt.s32.totalorder %s11, 1
        %s164 = scalar_select %p163, %s11, 1
        %s165 = smul.addr %s164, 8
        %s166 = scalar_lea.vmem %s0, %s165
      $region20: #{text_masking_transform_batch.1} parent=15 // pred_fallthru
        _
      // Predicated region
      $region21: #{text_masking_transform_batch.1} parent=15 // pred_check
        %p167 = pneg %p57
      $region22: #{text_masking_transform_batch.1} parent=15 // pred_check_branch
        %169 = sbr.rel (%p167) target = $region24
      $region23: #{text_masking_transform_batch.1} parent=15 // pred_region
        %p170 = scmp.lt.s32.totalorder %s11, 1
        %s171 = scalar_select %p170, %s11, 1
        %s172 = smul.addr %s171, 8
        %s173 = scalar_lea.vmem %s1, %s172
      $region24: #{text_masking_transform_batch.1} parent=15 // pred_fallthru
        _
      // Predicated region
      $region25: #{text_masking_transform_batch.1} parent=15 // pred_check
        %p174 = pneg %p83
      $region26: #{text_masking_transform_batch.1} parent=15 // pred_check_branch
        %176 = sbr.rel (%p174) target = $region28
      $region27: #{text_masking_transform_batch.1} parent=15 // pred_region
        %p177 = scmp.lt.s32.totalorder %s11, 1
        %s178 = scalar_select %p177, %s11, 1
        %s179 = smul.addr %s178, 8
        %s180 = scalar_lea.vmem %s2, %s179
      $region28: #{text_masking_transform_batch.1} parent=15 // pred_fallthru
        _
    $region16: #{text_masking_transform_batch.1} parent=5 // pred_fallthru
      _
    %p181 = scmp.le.s32.totalorder 1, %s11
    %p182 = scmp.lt.s32.totalorder %s11, 3
    %p183 = pnand %p181, %p182
    %p184 = pneg %p183
    // Predicated region
    $region29: #{text_masking_transform_batch.1} parent=5 // pred_check
      _
    $region30: #{text_masking_transform_batch.1} parent=5 // pred_check_branch
      %186 = sbr.rel (%p183) target = $region32
    $region31: #{text_masking_transform_batch.1} parent=5 // pred_region
      %s187 = ssub.s32 %s11, 1
      %p188 = scmp.lt.s32.totalorder %s16, 1
      %s189 = scalar_select %p188, %s16, 1
      %s190 = smul.addr %s189, 8
      %s191 = scalar_lea.vmem %s0, %s190
      %p192 = pneg %p37
      %p193 = pneg %p34
      %p194 = scmp.lt.s32.totalorder %s16, 1
      %s195 = scalar_select %p194, %s16, 1
      %s196 = smul.addr %s195, 8
      %s197 = scalar_lea.vmem %s1, %s196
      %p198 = pneg %p63
      %p199 = pneg %p60
      %p200 = scmp.lt.s32.totalorder %s16, 1
      %s201 = scalar_select %p200, %s16, 1
      %s202 = smul.addr %s201, 8
      %s203 = scalar_lea.vmem %s2, %s202
      %p204 = pneg %p89
      %p205 = pneg %p86
      %p206 = pneg %p115
      %p207 = pneg %p112
      %p208 = scmp.lt.s32.totalorder %s16, 1
      %s209 = scalar_select %p208, %s16, 1
      %s210 = smul.addr %s209, 8
      %s211 = scalar_lea.vmem %s3, %s210
      %p212 = pneg %p141
      %p213 = pneg %p138
      %p214 = scmp.lt.s32.totalorder %s16, 1
      %s215 = scalar_select %p214, %s16, 1
      %s216 = smul.addr %s215, 8
      %s217 = scalar_lea.vmem %s4, %s216
      %p218 = scmp.lt.s32.totalorder %s16, 1
      %s219 = scalar_select %p218, %s16, 1
      %s220 = smul.addr %s219, 8
      %s221 = scalar_lea.vmem %s0, %s220
      %p222 = scmp.lt.s32.totalorder %s16, 1
      %s223 = scalar_select %p222, %s16, 1
      %s224 = smul.addr %s223, 8
      %s225 = scalar_lea.vmem %s1, %s224
      %p226 = scmp.lt.s32.totalorder %s16, 1
      %s227 = scalar_select %p226, %s16, 1
      %s228 = smul.addr %s227, 8
      %s229 = scalar_lea.vmem %s2, %s228
      %p230 = scmp.lt.s32.totalorder %s16, 1
      %s231 = scalar_select %p230, %s16, 1
      %s232 = smul.addr %s231, 8
      %s233 = scalar_lea.vmem %s3, %s232
      %p234 = scmp.lt.s32.totalorder %s16, 1
      %s235 = scalar_select %p234, %s16, 1
      %s236 = smul.addr %s235, 8
      %s237 = scalar_lea.vmem %s4, %s236
      %v238 = vld [vmem:[%s221] sm:$0xff]
      %v239 = vlaneseq
      %v240 = vand.u32 %v239, 127
      %vm241 = vcmp.ge.s32.totalorder %v240, 1
      %242 = vset.pattern.permute.xlu0 0
      %243 = vperm.xlu0 %242, %v238
      %v244 = vpop.permute.xlu0 %243
      %vm245 = vcmp.le.s32.totalorder %v240, %v244
      %vm246 = vmand %vm241, %vm245
      %v247 = vld [vmem:[%s225] sm:$0xff]
      %v248 = vand.u32 %v247, 2147483520
      %v249 = vor.u32 %v248, %v240
      %v250 = vand.u32 %v249, 1073741824
      %vm251 = vcmp.eq.s32.totalorder %v250, 0
      %vm252 = vmand %vm246, %vm251
      %v253 = vsel %vm252, 1, 0
      %v254 = vand.u32 %v253, 65535
      %v255 = vshrl.u32 %v253, 16
      %v256 = vcvt.s32.f32 %v254
      %v257 = vcvt.s32.f32 %v255
      %258 = vadd.xlane.f32.xlu0 %v256
      %v259 = vpop.xlane.xlu0 %258
      %260 = vadd.xlane.f32.xlu0 %v257
      %v261 = vpop.xlane.xlu0 %260
      %v262 = vcvt.f32.s32 %v259
      %v263 = vcvt.f32.s32 %v261
      %v264 = vshll.u32 %v263, 16
      %v265 = vadd.s32 %v264, %v262
      %vm266 = vcmp.le.s32.totalorder %v238, %v265
      %vm267 = vmxor %vm266, 1
      %v268 = vsel %vm267, 1, 0
      %269 = vset.pattern.permute.xlu0 1
      %270 = vperm.xlu0 %269, %v268
      %v271 = vpop.permute.xlu0 %270
      %vm272 = vcmp.eq.s32.totalorder %v271, 1
      %vm273 = vmand %vm252, %vm272
      %v274 = vsel %vm266, 1, 0
      %275 = vset.pattern.permute.xlu0 1
      %276 = vperm.xlu0 %275, %v274
      %v277 = vpop.permute.xlu0 %276
      %vm278 = vcmp.eq.s32.totalorder %v277, 1
      %vm279 = vmxor %vm251, %vm278
      %vm280 = vmxor %vm279, 1
      %vm281 = vmand %vm246, %vm280
      %v282 = vsub.s32 %v238, %v265
      %v283 = vsel %vm266, %v238, %v282
      %v284 = vand.u32 %v249, 536870912
      %vm285 = vcmp.eq.s32.totalorder %v284, 0
      %vm286 = vmand %vm281, %vm285
      %v287 = vsel %vm286, 1, 0
      %v288 = vand.u32 %v287, 65535
      %v289 = vshrl.u32 %v287, 16
      %v290 = vcvt.s32.f32 %v288
      %v291 = vcvt.s32.f32 %v289
      %292 = vadd.xlane.f32.xlu0 %v290
      %v293 = vpop.xlane.xlu0 %292
      %294 = vadd.xlane.f32.xlu0 %v291
      %v295 = vpop.xlane.xlu0 %294
      %v296 = vcvt.f32.s32 %v293
      %v297 = vcvt.f32.s32 %v295
      %v298 = vshll.u32 %v297, 16
      %v299 = vadd.s32 %v298, %v296
      %vm300 = vcmp.le.s32.totalorder %v283, %v299
      %vm301 = vmxor %vm300, 1
      %v302 = vsel %vm301, 1, 0
      %303 = vset.pattern.permute.xlu0 1
      %304 = vperm.xlu0 %303, %v302
      %v305 = vpop.permute.xlu0 %304
      %vm306 = vcmp.eq.s32.totalorder %v305, 1
      %vm307 = vmand %vm286, %vm306
      %vm308 = vmor %vm273, %vm307
      %v309 = vsel %vm300, 1, 0
      %310 = vset.pattern.permute.xlu0 1
      %311 = vperm.xlu0 %310, %v309
      %v312 = vpop.permute.xlu0 %311
      %vm313 = vcmp.eq.s32.totalorder %v312, 1
      %vm314 = vmxor %vm285, %vm313
      %vm315 = vmxor %vm314, 1
      %vm316 = vmand %vm281, %vm315
      %v317 = vsub.s32 %v283, %v299
      %v318 = vsel %vm300, %v283, %v317
      %v319 = vand.u32 %v249, 268435456
      %vm320 = vcmp.eq.s32.totalorder %v319, 0
      %vm321 = vmand %vm316, %vm320
      %v322 = vsel %vm321, 1, 0
      %v323 = vand.u32 %v322, 65535
      %v324 = vshrl.u32 %v322, 16
      %v325 = vcvt.s32.f32 %v323
      %v326 = vcvt.s32.f32 %v324
      %327 = vadd.xlane.f32.xlu0 %v325
      %v328 = vpop.xlane.xlu0 %327
      %329 = vadd.xlane.f32.xlu0 %v326
      %v330 = vpop.xlane.xlu0 %329
      %v331 = vcvt.f32.s32 %v328
      %v332 = vcvt.f32.s32 %v330
      %v333 = vshll.u32 %v332, 16
      %v334 = vadd.s32 %v333, %v331
      %vm335 = vcmp.le.s32.totalorder %v318, %v334
      %vm336 = vmxor %vm335, 1
      %v337 = vsel %vm336, 1, 0
      %338 = vset.pattern.permute.xlu0 1
      %339 = vperm.xlu0 %338, %v337
      %v340 = vpop.permute.xlu0 %339
      %vm341 = vcmp.eq.s32.totalorder %v340, 1
      %vm342 = vmand %vm321, %vm341
      %vm343 = vmor %vm308, %vm342
      %v344 = vsel %vm335, 1, 0
      %345 = vset.pattern.permute.xlu0 1
      %346 = vperm.xlu0 %345, %v344
      %v347 = vpop.permute.xlu0 %346
      %vm348 = vcmp.eq.s32.totalorder %v347, 1
      %vm349 = vmxor %vm320, %vm348
      %vm350 = vmxor %vm349, 1
      %vm351 = vmand %vm316, %vm350
      %v352 = vsub.s32 %v318, %v334
      %v353 = vsel %vm335, %v318, %v352
      %v354 = vand.u32 %v249, 134217728
      %vm355 = vcmp.eq.s32.totalorder %v354, 0
      %vm356 = vmand %vm351, %vm355
      %v357 = vsel %vm356, 1, 0
      %v358 = vand.u32 %v357, 65535
      %v359 = vshrl.u32 %v357, 16
      %v360 = vcvt.s32.f32 %v358
      %v361 = vcvt.s32.f32 %v359
      %362 = vadd.xlane.f32.xlu0 %v360
      %v363 = vpop.xlane.xlu0 %362
      %364 = vadd.xlane.f32.xlu0 %v361
      %v365 = vpop.xlane.xlu0 %364
      %v366 = vcvt.f32.s32 %v363
      %v367 = vcvt.f32.s32 %v365
      %v368 = vshll.u32 %v367, 16
      %v369 = vadd.s32 %v368, %v366
      %vm370 = vcmp.le.s32.totalorder %v353, %v369
      %vm371 = vmxor %vm370, 1
      %v372 = vsel %vm371, 1, 0
      %373 = vset.pattern.permute.xlu0 1
      %374 = vperm.xlu0 %373, %v372
      %v375 = vpop.permute.xlu0 %374
      %vm376 = vcmp.eq.s32.totalorder %v375, 1
      %vm377 = vmand %vm356, %vm376
      %vm378 = vmor %vm343, %vm377
      %v379 = vsel %vm370, 1, 0
      %380 = vset.pattern.permute.xlu0 1
      %381 = vperm.xlu0 %380, %v379
      %v382 = vpop.permute.xlu0 %381
      %vm383 = vcmp.eq.s32.totalorder %v382, 1
      %vm384 = vmxor %vm355, %vm383
      %vm385 = vmxor %vm384, 1
      %vm386 = vmand %vm351, %vm385
      %v387 = vsub.s32 %v353, %v369
      %v388 = vsel %vm370, %v353, %v387
      %v389 = vand.u32 %v249, 67108864
      %vm390 = vcmp.eq.s32.totalorder %v389, 0
      %vm391 = vmand %vm386, %vm390
      %v392 = vsel %vm391, 1, 0
      %v393 = vand.u32 %v392, 65535
      %v394 = vshrl.u32 %v392, 16
      %v395 = vcvt.s32.f32 %v393
      %v396 = vcvt.s32.f32 %v394
      %397 = vadd.xlane.f32.xlu0 %v395
      %v398 = vpop.xlane.xlu0 %397
      %399 = vadd.xlane.f32.xlu0 %v396
      %v400 = vpop.xlane.xlu0 %399
      %v401 = vcvt.f32.s32 %v398
      %v402 = vcvt.f32.s32 %v400
      %v403 = vshll.u32 %v402, 16
      %v404 = vadd.s32 %v403, %v401
      %vm405 = vcmp.le.s32.totalorder %v388, %v404
      %vm406 = vmxor %vm405, 1
      %v407 = vsel %vm406, 1, 0
      %408 = vset.pattern.permute.xlu0 1
      %409 = vperm.xlu0 %408, %v407
      %v410 = vpop.permute.xlu0 %409
      %vm411 = vcmp.eq.s32.totalorder %v410, 1
      %vm412 = vmand %vm391, %vm411
      %vm413 = vmor %vm378, %vm412
      %v414 = vsel %vm405, 1, 0
      %415 = vset.pattern.permute.xlu0 1
      %416 = vperm.xlu0 %415, %v414
      %v417 = vpop.permute.xlu0 %416
      %vm418 = vcmp.eq.s32.totalorder %v417, 1
      %vm419 = vmxor %vm390, %vm418
      %vm420 = vmxor %vm419, 1
      %vm421 = vmand %vm386, %vm420
      %v422 = vsub.s32 %v388, %v404
      %v423 = vsel %vm405, %v388, %v422
      %v424 = vand.u32 %v249, 33554432
      %vm425 = vcmp.eq.s32.totalorder %v424, 0
      %vm426 = vmand %vm421, %vm425
      %v427 = vsel %vm426, 1, 0
      %v428 = vand.u32 %v427, 65535
      %v429 = vshrl.u32 %v427, 16
      %v430 = vcvt.s32.f32 %v428
      %v431 = vcvt.s32.f32 %v429
      %432 = vadd.xlane.f32.xlu0 %v430
      %v433 = vpop.xlane.xlu0 %432
      %434 = vadd.xlane.f32.xlu0 %v431
      %v435 = vpop.xlane.xlu0 %434
      %v436 = vcvt.f32.s32 %v433
      %v437 = vcvt.f32.s32 %v435
      %v438 = vshll.u32 %v437, 16
      %v439 = vadd.s32 %v438, %v436
      %vm440 = vcmp.le.s32.totalorder %v423, %v439
      %vm441 = vmxor %vm440, 1
      %v442 = vsel %vm441, 1, 0
      %443 = vset.pattern.permute.xlu0 1
      %444 = vperm.xlu0 %443, %v442
      %v445 = vpop.permute.xlu0 %444
      %vm446 = vcmp.eq.s32.totalorder %v445, 1
      %vm447 = vmand %vm426, %vm446
      %vm448 = vmor %vm413, %vm447
      %v449 = vsel %vm440, 1, 0
      %450 = vset.pattern.permute.xlu0 1
      %451 = vperm.xlu0 %450, %v449
      %v452 = vpop.permute.xlu0 %451
      %vm453 = vcmp.eq.s32.totalorder %v452, 1
      %vm454 = vmxor %vm425, %vm453
      %vm455 = vmxor %vm454, 1
      %vm456 = vmand %vm421, %vm455
      %v457 = vsub.s32 %v423, %v439
      %v458 = vsel %vm440, %v423, %v457
      %v459 = vand.u32 %v249, 16777216
      %vm460 = vcmp.eq.s32.totalorder %v459, 0
      %vm461 = vmand %vm456, %vm460
      %v462 = vsel %vm461, 1, 0
      %v463 = vand.u32 %v462, 65535
      %v464 = vshrl.u32 %v462, 16
      %v465 = vcvt.s32.f32 %v463
      %v466 = vcvt.s32.f32 %v464
      %467 = vadd.xlane.f32.xlu0 %v465
      %v468 = vpop.xlane.xlu0 %467
      %469 = vadd.xlane.f32.xlu0 %v466
      %v470 = vpop.xlane.xlu0 %469
      %v471 = vcvt.f32.s32 %v468
      %v472 = vcvt.f32.s32 %v470
      %v473 = vshll.u32 %v472, 16
      %v474 = vadd.s32 %v473, %v471
      %vm475 = vcmp.le.s32.totalorder %v458, %v474
      %vm476 = vmxor %vm475, 1
      %v477 = vsel %vm476, 1, 0
      %478 = vset.pattern.permute.xlu0 1
      %479 = vperm.xlu0 %478, %v477
      %v480 = vpop.permute.xlu0 %479
      %vm481 = vcmp.eq.s32.totalorder %v480, 1
      %vm482 = vmand %vm461, %vm481
      %vm483 = vmor %vm448, %vm482
      %v484 = vsel %vm475, 1, 0
      %485 = vset.pattern.permute.xlu0 1
      %486 = vperm.xlu0 %485, %v484
      %v487 = vpop.permute.xlu0 %486
      %vm488 = vcmp.eq.s32.totalorder %v487, 1
      %vm489 = vmxor %vm460, %vm488
      %vm490 = vmxor %vm489, 1
      %vm491 = vmand %vm456, %vm490
      %v492 = vsub.s32 %v458, %v474
      %v493 = vsel %vm475, %v458, %v492
      %v494 = vand.u32 %v249, 8388608
      %vm495 = vcmp.eq.s32.totalorder %v494, 0
      %vm496 = vmand %vm491, %vm495
      %v497 = vsel %vm496, 1, 0
      %v498 = vand.u32 %v497, 65535
      %v499 = vshrl.u32 %v497, 16
      %v500 = vcvt.s32.f32 %v498
      %v501 = vcvt.s32.f32 %v499
      %502 = vadd.xlane.f32.xlu0 %v500
      %v503 = vpop.xlane.xlu0 %502
      %504 = vadd.xlane.f32.xlu0 %v501
      %v505 = vpop.xlane.xlu0 %504
      %v506 = vcvt.f32.s32 %v503
      %v507 = vcvt.f32.s32 %v505
      %v508 = vshll.u32 %v507, 16
      %v509 = vadd.s32 %v508, %v506
      %vm510 = vcmp.le.s32.totalorder %v493, %v509
      %vm511 = vmxor %vm510, 1
      %v512 = vsel %vm511, 1, 0
      %513 = vset.pattern.permute.xlu0 1
      %514 = vperm.xlu0 %513, %v512
      %v515 = vpop.permute.xlu0 %514
      %vm516 = vcmp.eq.s32.totalorder %v515, 1
      %vm517 = vmand %vm496, %vm516
      %vm518 = vmor %vm483, %vm517
      %v519 = vsel %vm510, 1, 0
      %520 = vset.pattern.permute.xlu0 1
      %521 = vperm.xlu0 %520, %v519
      %v522 = vpop.permute.xlu0 %521
      %vm523 = vcmp.eq.s32.totalorder %v522, 1
      %vm524 = vmxor %vm495, %vm523
      %vm525 = vmxor %vm524, 1
      %vm526 = vmand %vm491, %vm525
      %v527 = vsub.s32 %v493, %v509
      %v528 = vsel %vm510, %v493, %v527
      %v529 = vand.u32 %v249, 4194304
      %vm530 = vcmp.eq.s32.totalorder %v529, 0
      %vm531 = vmand %vm526, %vm530
      %v532 = vsel %vm531, 1, 0
      %v533 = vand.u32 %v532, 65535
      %v534 = vshrl.u32 %v532, 16
      %v535 = vcvt.s32.f32 %v533
      %v536 = vcvt.s32.f32 %v534
      %537 = vadd.xlane.f32.xlu0 %v535
      %v538 = vpop.xlane.xlu0 %537
      %539 = vadd.xlane.f32.xlu0 %v536
      %v540 = vpop.xlane.xlu0 %539
      %v541 = vcvt.f32.s32 %v538
      %v542 = vcvt.f32.s32 %v540
      %v543 = vshll.u32 %v542, 16
      %v544 = vadd.s32 %v543, %v541
      %vm545 = vcmp.le.s32.totalorder %v528, %v544
      %vm546 = vmxor %vm545, 1
      %v547 = vsel %vm546, 1, 0
      %548 = vset.pattern.permute.xlu0 1
      %549 = vperm.xlu0 %548, %v547
      %v550 = vpop.permute.xlu0 %549
      %vm551 = vcmp.eq.s32.totalorder %v550, 1
      %vm552 = vmand %vm531, %vm551
      %vm553 = vmor %vm518, %vm552
      %v554 = vsel %vm545, 1, 0
      %555 = vset.pattern.permute.xlu0 1
      %556 = vperm.xlu0 %555, %v554
      %v557 = vpop.permute.xlu0 %556
      %vm558 = vcmp.eq.s32.totalorder %v557, 1
      %vm559 = vmxor %vm530, %vm558
      %vm560 = vmxor %vm559, 1
      %vm561 = vmand %vm526, %vm560
      %v562 = vsub.s32 %v528, %v544
      %v563 = vsel %vm545, %v528, %v562
      %v564 = vand.u32 %v249, 2097152
      %vm565 = vcmp.eq.s32.totalorder %v564, 0
      %vm566 = vmand %vm561, %vm565
      %v567 = vsel %vm566, 1, 0
      %v568 = vand.u32 %v567, 65535
      %v569 = vshrl.u32 %v567, 16
      %v570 = vcvt.s32.f32 %v568
      %v571 = vcvt.s32.f32 %v569
      %572 = vadd.xlane.f32.xlu0 %v570
      %v573 = vpop.xlane.xlu0 %572
      %574 = vadd.xlane.f32.xlu0 %v571
      %v575 = vpop.xlane.xlu0 %574
      %v576 = vcvt.f32.s32 %v573
      %v577 = vcvt.f32.s32 %v575
      %v578 = vshll.u32 %v577, 16
      %v579 = vadd.s32 %v578, %v576
      %vm580 = vcmp.le.s32.totalorder %v563, %v579
      %vm581 = vmxor %vm580, 1
      %v582 = vsel %vm581, 1, 0
      %583 = vset.pattern.permute.xlu0 1
      %584 = vperm.xlu0 %583, %v582
      %v585 = vpop.permute.xlu0 %584
      %vm586 = vcmp.eq.s32.totalorder %v585, 1
      %vm587 = vmand %vm566, %vm586
      %vm588 = vmor %vm553, %vm587
      %v589 = vsel %vm580, 1, 0
      %590 = vset.pattern.permute.xlu0 1
      %591 = vperm.xlu0 %590, %v589
      %v592 = vpop.permute.xlu0 %591
      %vm593 = vcmp.eq.s32.totalorder %v592, 1
      %vm594 = vmxor %vm565, %vm593
      %vm595 = vmxor %vm594, 1
      %vm596 = vmand %vm561, %vm595
      %v597 = vsub.s32 %v563, %v579
      %v598 = vsel %vm580, %v563, %v597
      %v599 = vand.u32 %v249, 1048576
      %vm600 = vcmp.eq.s32.totalorder %v599, 0
      %vm601 = vmand %vm596, %vm600
      %v602 = vsel %vm601, 1, 0
      %v603 = vand.u32 %v602, 65535
      %v604 = vshrl.u32 %v602, 16
      %v605 = vcvt.s32.f32 %v603
      %v606 = vcvt.s32.f32 %v604
      %607 = vadd.xlane.f32.xlu0 %v605
      %v608 = vpop.xlane.xlu0 %607
      %609 = vadd.xlane.f32.xlu0 %v606
      %v610 = vpop.xlane.xlu0 %609
      %v611 = vcvt.f32.s32 %v608
      %v612 = vcvt.f32.s32 %v610
      %v613 = vshll.u32 %v612, 16
      %v614 = vadd.s32 %v613, %v611
      %vm615 = vcmp.le.s32.totalorder %v598, %v614
      %vm616 = vmxor %vm615, 1
      %v617 = vsel %vm616, 1, 0
      %618 = vset.pattern.permute.xlu0 1
      %619 = vperm.xlu0 %618, %v617
      %v620 = vpop.permute.xlu0 %619
      %vm621 = vcmp.eq.s32.totalorder %v620, 1
      %vm622 = vmand %vm601, %vm621
      %vm623 = vmor %vm588, %vm622
      %v624 = vsel %vm615, 1, 0
      %625 = vset.pattern.permute.xlu0 1
      %626 = vperm.xlu0 %625, %v624
      %v627 = vpop.permute.xlu0 %626
      %vm628 = vcmp.eq.s32.totalorder %v627, 1
      %vm629 = vmxor %vm600, %vm628
      %vm630 = vmxor %vm629, 1
      %vm631 = vmand %vm596, %vm630
      %v632 = vsub.s32 %v598, %v614
      %v633 = vsel %vm615, %v598, %v632
      %v634 = vand.u32 %v249, 524288
      %vm635 = vcmp.eq.s32.totalorder %v634, 0
      %vm636 = vmand %vm631, %vm635
      %v637 = vsel %vm636, 1, 0
      %v638 = vand.u32 %v637, 65535
      %v639 = vshrl.u32 %v637, 16
      %v640 = vcvt.s32.f32 %v638
      %v641 = vcvt.s32.f32 %v639
      %642 = vadd.xlane.f32.xlu0 %v640
      %v643 = vpop.xlane.xlu0 %642
      %644 = vadd.xlane.f32.xlu0 %v641
      %v645 = vpop.xlane.xlu0 %644
      %v646 = vcvt.f32.s32 %v643
      %v647 = vcvt.f32.s32 %v645
      %v648 = vshll.u32 %v647, 16
      %v649 = vadd.s32 %v648, %v646
      %vm650 = vcmp.le.s32.totalorder %v633, %v649
      %vm651 = vmxor %vm650, 1
      %v652 = vsel %vm651, 1, 0
      %653 = vset.pattern.permute.xlu0 1
      %654 = vperm.xlu0 %653, %v652
      %v655 = vpop.permute.xlu0 %654
      %vm656 = vcmp.eq.s32.totalorder %v655, 1
      %vm657 = vmand %vm636, %vm656
      %vm658 = vmor %vm623, %vm657
      %v659 = vsel %vm650, 1, 0
      %660 = vset.pattern.permute.xlu0 1
      %661 = vperm.xlu0 %660, %v659
      %v662 = vpop.permute.xlu0 %661
      %vm663 = vcmp.eq.s32.totalorder %v662, 1
      %vm664 = vmxor %vm635, %vm663
      %vm665 = vmxor %vm664, 1
      %vm666 = vmand %vm631, %vm665
      %v667 = vsub.s32 %v633, %v649
      %v668 = vsel %vm650, %v633, %v667
      %v669 = vand.u32 %v249, 262144
      %vm670 = vcmp.eq.s32.totalorder %v669, 0
      %vm671 = vmand %vm666, %vm670
      %v672 = vsel %vm671, 1, 0
      %v673 = vand.u32 %v672, 65535
      %v674 = vshrl.u32 %v672, 16
      %v675 = vcvt.s32.f32 %v673
      %v676 = vcvt.s32.f32 %v674
      %677 = vadd.xlane.f32.xlu0 %v675
      %v678 = vpop.xlane.xlu0 %677
      %679 = vadd.xlane.f32.xlu0 %v676
      %v680 = vpop.xlane.xlu0 %679
      %v681 = vcvt.f32.s32 %v678
      %v682 = vcvt.f32.s32 %v680
      %v683 = vshll.u32 %v682, 16
      %v684 = vadd.s32 %v683, %v681
      %vm685 = vcmp.le.s32.totalorder %v668, %v684
      %vm686 = vmxor %vm685, 1
      %v687 = vsel %vm686, 1, 0
      %688 = vset.pattern.permute.xlu0 1
      %689 = vperm.xlu0 %688, %v687
      %v690 = vpop.permute.xlu0 %689
      %vm691 = vcmp.eq.s32.totalorder %v690, 1
      %vm692 = vmand %vm671, %vm691
      %vm693 = vmor %vm658, %vm692
      %v694 = vsel %vm685, 1, 0
      %695 = vset.pattern.permute.xlu0 1
      %696 = vperm.xlu0 %695, %v694
      %v697 = vpop.permute.xlu0 %696
      %vm698 = vcmp.eq.s32.totalorder %v697, 1
      %vm699 = vmxor %vm670, %vm698
      %vm700 = vmxor %vm699, 1
      %vm701 = vmand %vm666, %vm700
      %v702 = vsub.s32 %v668, %v684
      %v703 = vsel %vm685, %v668, %v702
      %v704 = vand.u32 %v249, 131072
      %vm705 = vcmp.eq.s32.totalorder %v704, 0
      %vm706 = vmand %vm701, %vm705
      %v707 = vsel %vm706, 1, 0
      %v708 = vand.u32 %v707, 65535
      %v709 = vshrl.u32 %v707, 16
      %v710 = vcvt.s32.f32 %v708
      %v711 = vcvt.s32.f32 %v709
      %712 = vadd.xlane.f32.xlu0 %v710
      %v713 = vpop.xlane.xlu0 %712
      %714 = vadd.xlane.f32.xlu0 %v711
      %v715 = vpop.xlane.xlu0 %714
      %v716 = vcvt.f32.s32 %v713
      %v717 = vcvt.f32.s32 %v715
      %v718 = vshll.u32 %v717, 16
      %v719 = vadd.s32 %v718, %v716
      %vm720 = vcmp.le.s32.totalorder %v703, %v719
      %vm721 = vmxor %vm720, 1
      %v722 = vsel %vm721, 1, 0
      %723 = vset.pattern.permute.xlu0 1
      %724 = vperm.xlu0 %723, %v722
      %v725 = vpop.permute.xlu0 %724
      %vm726 = vcmp.eq.s32.totalorder %v725, 1
      %vm727 = vmand %vm706, %vm726
      %vm728 = vmor %vm693, %vm727
      %v729 = vsel %vm720, 1, 0
      %730 = vset.pattern.permute.xlu0 1
      %731 = vperm.xlu0 %730, %v729
      %v732 = vpop.permute.xlu0 %731
      %vm733 = vcmp.eq.s32.totalorder %v732, 1
      %vm734 = vmxor %vm705, %vm733
      %vm735 = vmxor %vm734, 1
      %vm736 = vmand %vm701, %vm735
      %v737 = vsub.s32 %v703, %v719
      %v738 = vsel %vm720, %v703, %v737
      %v739 = vand.u32 %v249, 65536
      %vm740 = vcmp.eq.s32.totalorder %v739, 0
      %vm741 = vmand %vm736, %vm740
      %v742 = vsel %vm741, 1, 0
      %v743 = vand.u32 %v742, 65535
      %v744 = vshrl.u32 %v742, 16
      %v745 = vcvt.s32.f32 %v743
      %v746 = vcvt.s32.f32 %v744
      %747 = vadd.xlane.f32.xlu0 %v745
      %v748 = vpop.xlane.xlu0 %747
      %749 = vadd.xlane.f32.xlu0 %v746
      %v750 = vpop.xlane.xlu0 %749
      %v751 = vcvt.f32.s32 %v748
      %v752 = vcvt.f32.s32 %v750
      %v753 = vshll.u32 %v752, 16
      %v754 = vadd.s32 %v753, %v751
      %vm755 = vcmp.le.s32.totalorder %v738, %v754
      %vm756 = vmxor %vm755, 1
      %v757 = vsel %vm756, 1, 0
      %758 = vset.pattern.permute.xlu0 1
      %759 = vperm.xlu0 %758, %v757
      %v760 = vpop.permute.xlu0 %759
      %vm761 = vcmp.eq.s32.totalorder %v760, 1
      %vm762 = vmand %vm741, %vm761
      %vm763 = vmor %vm728, %vm762
      %v764 = vsel %vm755, 1, 0
      %765 = vset.pattern.permute.xlu0 1
      %766 = vperm.xlu0 %765, %v764
      %v767 = vpop.permute.xlu0 %766
      %vm768 = vcmp.eq.s32.totalorder %v767, 1
      %vm769 = vmxor %vm740, %vm768
      %vm770 = vmxor %vm769, 1
      %vm771 = vmand %vm736, %vm770
      %v772 = vsub.s32 %v738, %v754
      %v773 = vsel %vm755, %v738, %v772
      %v774 = vand.u32 %v249, 32768
      %vm775 = vcmp.eq.s32.totalorder %v774, 0
      %vm776 = vmand %vm771, %vm775
      %v777 = vsel %vm776, 1, 0
      %v778 = vand.u32 %v777, 65535
      %v779 = vshrl.u32 %v777, 16
      %v780 = vcvt.s32.f32 %v778
      %v781 = vcvt.s32.f32 %v779
      %782 = vadd.xlane.f32.xlu0 %v780
      %v783 = vpop.xlane.xlu0 %782
      %784 = vadd.xlane.f32.xlu0 %v781
      %v785 = vpop.xlane.xlu0 %784
      %v786 = vcvt.f32.s32 %v783
      %v787 = vcvt.f32.s32 %v785
      %v788 = vshll.u32 %v787, 16
      %v789 = vadd.s32 %v788, %v786
      %vm790 = vcmp.le.s32.totalorder %v773, %v789
      %vm791 = vmxor %vm790, 1
      %v792 = vsel %vm791, 1, 0
      %793 = vset.pattern.permute.xlu0 1
      %794 = vperm.xlu0 %793, %v792
      %v795 = vpop.permute.xlu0 %794
      %vm796 = vcmp.eq.s32.totalorder %v795, 1
      %vm797 = vmand %vm776, %vm796
      %vm798 = vmor %vm763, %vm797
      %v799 = vsel %vm790, 1, 0
      %800 = vset.pattern.permute.xlu0 1
      %801 = vperm.xlu0 %800, %v799
      %v802 = vpop.permute.xlu0 %801
      %vm803 = vcmp.eq.s32.totalorder %v802, 1
      %vm804 = vmxor %vm775, %vm803
      %vm805 = vmxor %vm804, 1
      %vm806 = vmand %vm771, %vm805
      %v807 = vsub.s32 %v773, %v789
      %v808 = vsel %vm790, %v773, %v807
      %v809 = vand.u32 %v249, 16384
      %vm810 = vcmp.eq.s32.totalorder %v809, 0
      %vm811 = vmand %vm806, %vm810
      %v812 = vsel %vm811, 1, 0
      %v813 = vand.u32 %v812, 65535
      %v814 = vshrl.u32 %v812, 16
      %v815 = vcvt.s32.f32 %v813
      %v816 = vcvt.s32.f32 %v814
      %817 = vadd.xlane.f32.xlu0 %v815
      %v818 = vpop.xlane.xlu0 %817
      %819 = vadd.xlane.f32.xlu0 %v816
      %v820 = vpop.xlane.xlu0 %819
      %v821 = vcvt.f32.s32 %v818
      %v822 = vcvt.f32.s32 %v820
      %v823 = vshll.u32 %v822, 16
      %v824 = vadd.s32 %v823, %v821
      %vm825 = vcmp.le.s32.totalorder %v808, %v824
      %vm826 = vmxor %vm825, 1
      %v827 = vsel %vm826, 1, 0
      %828 = vset.pattern.permute.xlu0 1
      %829 = vperm.xlu0 %828, %v827
      %v830 = vpop.permute.xlu0 %829
      %vm831 = vcmp.eq.s32.totalorder %v830, 1
      %vm832 = vmand %vm811, %vm831
      %vm833 = vmor %vm798, %vm832
      %v834 = vsel %vm825, 1, 0
      %835 = vset.pattern.permute.xlu0 1
      %836 = vperm.xlu0 %835, %v834
      %v837 = vpop.permute.xlu0 %836
      %vm838 = vcmp.eq.s32.totalorder %v837, 1
      %vm839 = vmxor %vm810, %vm838
      %vm840 = vmxor %vm839, 1
      %vm841 = vmand %vm806, %vm840
      %v842 = vsub.s32 %v808, %v824
      %v843 = vsel %vm825, %v808, %v842
      %v844 = vand.u32 %v249, 8192
      %vm845 = vcmp.eq.s32.totalorder %v844, 0
      %vm846 = vmand %vm841, %vm845
      %v847 = vsel %vm846, 1, 0
      %v848 = vand.u32 %v847, 65535
      %v849 = vshrl.u32 %v847, 16
      %v850 = vcvt.s32.f32 %v848
      %v851 = vcvt.s32.f32 %v849
      %852 = vadd.xlane.f32.xlu0 %v850
      %v853 = vpop.xlane.xlu0 %852
      %854 = vadd.xlane.f32.xlu0 %v851
      %v855 = vpop.xlane.xlu0 %854
      %v856 = vcvt.f32.s32 %v853
      %v857 = vcvt.f32.s32 %v855
      %v858 = vshll.u32 %v857, 16
      %v859 = vadd.s32 %v858, %v856
      %vm860 = vcmp.le.s32.totalorder %v843, %v859
      %vm861 = vmxor %vm860, 1
      %v862 = vsel %vm861, 1, 0
      %863 = vset.pattern.permute.xlu0 1
      %864 = vperm.xlu0 %863, %v862
      %v865 = vpop.permute.xlu0 %864
      %vm866 = vcmp.eq.s32.totalorder %v865, 1
      %vm867 = vmand %vm846, %vm866
      %vm868 = vmor %vm833, %vm867
      %v869 = vsel %vm860, 1, 0
      %870 = vset.pattern.permute.xlu0 1
      %871 = vperm.xlu0 %870, %v869
      %v872 = vpop.permute.xlu0 %871
      %vm873 = vcmp.eq.s32.totalorder %v872, 1
      %vm874 = vmxor %vm845, %vm873
      %vm875 = vmxor %vm874, 1
      %vm876 = vmand %vm841, %vm875
      %v877 = vsub.s32 %v843, %v859
      %v878 = vsel %vm860, %v843, %v877
      %v879 = vand.u32 %v249, 4096
      %vm880 = vcmp.eq.s32.totalorder %v879, 0
      %vm881 = vmand %vm876, %vm880
      %v882 = vsel %vm881, 1, 0
      %v883 = vand.u32 %v882, 65535
      %v884 = vshrl.u32 %v882, 16
      %v885 = vcvt.s32.f32 %v883
      %v886 = vcvt.s32.f32 %v884
      %887 = vadd.xlane.f32.xlu0 %v885
      %v888 = vpop.xlane.xlu0 %887
      %889 = vadd.xlane.f32.xlu0 %v886
      %v890 = vpop.xlane.xlu0 %889
      %v891 = vcvt.f32.s32 %v888
      %v892 = vcvt.f32.s32 %v890
      %v893 = vshll.u32 %v892, 16
      %v894 = vadd.s32 %v893, %v891
      %vm895 = vcmp.le.s32.totalorder %v878, %v894
      %vm896 = vmxor %vm895, 1
      %v897 = vsel %vm896, 1, 0
      %898 = vset.pattern.permute.xlu0 1
      %899 = vperm.xlu0 %898, %v897
      %v900 = vpop.permute.xlu0 %899
      %vm901 = vcmp.eq.s32.totalorder %v900, 1
      %vm902 = vmand %vm881, %vm901
      %vm903 = vmor %vm868, %vm902
      %v904 = vsel %vm895, 1, 0
      %905 = vset.pattern.permute.xlu0 1
      %906 = vperm.xlu0 %905, %v904
      %v907 = vpop.permute.xlu0 %906
      %vm908 = vcmp.eq.s32.totalorder %v907, 1
      %vm909 = vmxor %vm880, %vm908
      %vm910 = vmxor %vm909, 1
      %vm911 = vmand %vm876, %vm910
      %v912 = vsub.s32 %v878, %v894
      %v913 = vsel %vm895, %v878, %v912
      %v914 = vand.u32 %v249, 2048
      %vm915 = vcmp.eq.s32.totalorder %v914, 0
      %vm916 = vmand %vm911, %vm915
      %v917 = vsel %vm916, 1, 0
      %v918 = vand.u32 %v917, 65535
      %v919 = vshrl.u32 %v917, 16
      %v920 = vcvt.s32.f32 %v918
      %v921 = vcvt.s32.f32 %v919
      %922 = vadd.xlane.f32.xlu0 %v920
      %v923 = vpop.xlane.xlu0 %922
      %924 = vadd.xlane.f32.xlu0 %v921
      %v925 = vpop.xlane.xlu0 %924
      %v926 = vcvt.f32.s32 %v923
      %v927 = vcvt.f32.s32 %v925
      %v928 = vshll.u32 %v927, 16
      %v929 = vadd.s32 %v928, %v926
      %vm930 = vcmp.le.s32.totalorder %v913, %v929
      %vm931 = vmxor %vm930, 1
      %v932 = vsel %vm931, 1, 0
      %933 = vset.pattern.permute.xlu0 1
      %934 = vperm.xlu0 %933, %v932
      %v935 = vpop.permute.xlu0 %934
      %vm936 = vcmp.eq.s32.totalorder %v935, 1
      %vm937 = vmand %vm916, %vm936
      %vm938 = vmor %vm903, %vm937
      %v939 = vsel %vm930, 1, 0
      %940 = vset.pattern.permute.xlu0 1
      %941 = vperm.xlu0 %940, %v939
      %v942 = vpop.permute.xlu0 %941
      %vm943 = vcmp.eq.s32.totalorder %v942, 1
      %vm944 = vmxor %vm915, %vm943
      %vm945 = vmxor %vm944, 1
      %vm946 = vmand %vm911, %vm945
      %v947 = vsub.s32 %v913, %v929
      %v948 = vsel %vm930, %v913, %v947
      %v949 = vand.u32 %v249, 1024
      %vm950 = vcmp.eq.s32.totalorder %v949, 0
      %vm951 = vmand %vm946, %vm950
      %v952 = vsel %vm951, 1, 0
      %v953 = vand.u32 %v952, 65535
      %v954 = vshrl.u32 %v952, 16
      %v955 = vcvt.s32.f32 %v953
      %v956 = vcvt.s32.f32 %v954
      %957 = vadd.xlane.f32.xlu0 %v955
      %v958 = vpop.xlane.xlu0 %957
      %959 = vadd.xlane.f32.xlu0 %v956
      %v960 = vpop.xlane.xlu0 %959
      %v961 = vcvt.f32.s32 %v958
      %v962 = vcvt.f32.s32 %v960
      %v963 = vshll.u32 %v962, 16
      %v964 = vadd.s32 %v963, %v961
      %vm965 = vcmp.le.s32.totalorder %v948, %v964
      %vm966 = vmxor %vm965, 1
      %v967 = vsel %vm966, 1, 0
      %968 = vset.pattern.permute.xlu0 1
      %969 = vperm.xlu0 %968, %v967
      %v970 = vpop.permute.xlu0 %969
      %vm971 = vcmp.eq.s32.totalorder %v970, 1
      %vm972 = vmand %vm951, %vm971
      %vm973 = vmor %vm938, %vm972
      %v974 = vsel %vm965, 1, 0
      %975 = vset.pattern.permute.xlu0 1
      %976 = vperm.xlu0 %975, %v974
      %v977 = vpop.permute.xlu0 %976
      %vm978 = vcmp.eq.s32.totalorder %v977, 1
      %vm979 = vmxor %vm950, %vm978
      %vm980 = vmxor %vm979, 1
      %vm981 = vmand %vm946, %vm980
      %v982 = vsub.s32 %v948, %v964
      %v983 = vsel %vm965, %v948, %v982
      %v984 = vand.u32 %v249, 512
      %vm985 = vcmp.eq.s32.totalorder %v984, 0
      %vm986 = vmand %vm981, %vm985
      %v987 = vsel %vm986, 1, 0
      %v988 = vand.u32 %v987, 65535
      %v989 = vshrl.u32 %v987, 16
      %v990 = vcvt.s32.f32 %v988
      %v991 = vcvt.s32.f32 %v989
      %992 = vadd.xlane.f32.xlu0 %v990
      %v993 = vpop.xlane.xlu0 %992
      %994 = vadd.xlane.f32.xlu0 %v991
      %v995 = vpop.xlane.xlu0 %994
      %v996 = vcvt.f32.s32 %v993
      %v997 = vcvt.f32.s32 %v995
      %v998 = vshll.u32 %v997, 16
      %v999 = vadd.s32 %v998, %v996
      %vm1000 = vcmp.le.s32.totalorder %v983, %v999
      %vm1001 = vmxor %vm1000, 1
      %v1002 = vsel %vm1001, 1, 0
      %1003 = vset.pattern.permute.xlu0 1
      %1004 = vperm.xlu0 %1003, %v1002
      %v1005 = vpop.permute.xlu0 %1004
      %vm1006 = vcmp.eq.s32.totalorder %v1005, 1
      %vm1007 = vmand %vm986, %vm1006
      %vm1008 = vmor %vm973, %vm1007
      %v1009 = vsel %vm1000, 1, 0
      %1010 = vset.pattern.permute.xlu0 1
      %1011 = vperm.xlu0 %1010, %v1009
      %v1012 = vpop.permute.xlu0 %1011
      %vm1013 = vcmp.eq.s32.totalorder %v1012, 1
      %vm1014 = vmxor %vm985, %vm1013
      %vm1015 = vmxor %vm1014, 1
      %vm1016 = vmand %vm981, %vm1015
      %v1017 = vsub.s32 %v983, %v999
      %v1018 = vsel %vm1000, %v983, %v1017
      %v1019 = vand.u32 %v249, 256
      %vm1020 = vcmp.eq.s32.totalorder %v1019, 0
      %vm1021 = vmand %vm1016, %vm1020
      %v1022 = vsel %vm1021, 1, 0
      %v1023 = vand.u32 %v1022, 65535
      %v1024 = vshrl.u32 %v1022, 16
      %v1025 = vcvt.s32.f32 %v1023
      %v1026 = vcvt.s32.f32 %v1024
      %1027 = vadd.xlane.f32.xlu0 %v1025
      %v1028 = vpop.xlane.xlu0 %1027
      %1029 = vadd.xlane.f32.xlu0 %v1026
      %v1030 = vpop.xlane.xlu0 %1029
      %v1031 = vcvt.f32.s32 %v1028
      %v1032 = vcvt.f32.s32 %v1030
      %v1033 = vshll.u32 %v1032, 16
      %v1034 = vadd.s32 %v1033, %v1031
      %vm1035 = vcmp.le.s32.totalorder %v1018, %v1034
      %vm1036 = vmxor %vm1035, 1
      %v1037 = vsel %vm1036, 1, 0
      %1038 = vset.pattern.permute.xlu0 1
      %1039 = vperm.xlu0 %1038, %v1037
      %v1040 = vpop.permute.xlu0 %1039
      %vm1041 = vcmp.eq.s32.totalorder %v1040, 1
      %vm1042 = vmand %vm1021, %vm1041
      %vm1043 = vmor %vm1008, %vm1042
      %v1044 = vsel %vm1035, 1, 0
      %1045 = vset.pattern.permute.xlu0 1
      %1046 = vperm.xlu0 %1045, %v1044
      %v1047 = vpop.permute.xlu0 %1046
      %vm1048 = vcmp.eq.s32.totalorder %v1047, 1
      %vm1049 = vmxor %vm1020, %vm1048
      %vm1050 = vmxor %vm1049, 1
      %vm1051 = vmand %vm1016, %vm1050
      %v1052 = vsub.s32 %v1018, %v1034
      %v1053 = vsel %vm1035, %v1018, %v1052
      %v1054 = vand.u32 %v249, 128
      %vm1055 = vcmp.eq.s32.totalorder %v1054, 0
      %vm1056 = vmand %vm1051, %vm1055
      %v1057 = vsel %vm1056, 1, 0
      %v1058 = vand.u32 %v1057, 65535
      %v1059 = vshrl.u32 %v1057, 16
      %v1060 = vcvt.s32.f32 %v1058
      %v1061 = vcvt.s32.f32 %v1059
      %1062 = vadd.xlane.f32.xlu0 %v1060
      %v1063 = vpop.xlane.xlu0 %1062
      %1064 = vadd.xlane.f32.xlu0 %v1061
      %v1065 = vpop.xlane.xlu0 %1064
      %v1066 = vcvt.f32.s32 %v1063
      %v1067 = vcvt.f32.s32 %v1065
      %v1068 = vshll.u32 %v1067, 16
      %v1069 = vadd.s32 %v1068, %v1066
      %vm1070 = vcmp.le.s32.totalorder %v1053, %v1069
      %vm1071 = vmxor %vm1070, 1
      %v1072 = vsel %vm1071, 1, 0
      %1073 = vset.pattern.permute.xlu0 1
      %1074 = vperm.xlu0 %1073, %v1072
      %v1075 = vpop.permute.xlu0 %1074
      %vm1076 = vcmp.eq.s32.totalorder %v1075, 1
      %vm1077 = vmand %vm1056, %vm1076
      %vm1078 = vmor %vm1043, %vm1077
      %v1079 = vsel %vm1070, 1, 0
      %1080 = vset.pattern.permute.xlu0 1
      %1081 = vperm.xlu0 %1080, %v1079
      %v1082 = vpop.permute.xlu0 %1081
      %vm1083 = vcmp.eq.s32.totalorder %v1082, 1
      %vm1084 = vmxor %vm1055, %vm1083
      %vm1085 = vmxor %vm1084, 1
      %vm1086 = vmand %vm1051, %vm1085
      %v1087 = vsub.s32 %v1053, %v1069
      %v1088 = vsel %vm1070, %v1053, %v1087
      %v1089 = vand.u32 %v249, 64
      %vm1090 = vcmp.eq.s32.totalorder %v1089, 0
      %vm1091 = vmand %vm1086, %vm1090
      %v1092 = vsel %vm1091, 1, 0
      %v1093 = vand.u32 %v1092, 65535
      %v1094 = vshrl.u32 %v1092, 16
      %v1095 = vcvt.s32.f32 %v1093
      %v1096 = vcvt.s32.f32 %v1094
      %1097 = vadd.xlane.f32.xlu0 %v1095
      %v1098 = vpop.xlane.xlu0 %1097
      %1099 = vadd.xlane.f32.xlu0 %v1096
      %v1100 = vpop.xlane.xlu0 %1099
      %v1101 = vcvt.f32.s32 %v1098
      %v1102 = vcvt.f32.s32 %v1100
      %v1103 = vshll.u32 %v1102, 16
      %v1104 = vadd.s32 %v1103, %v1101
      %vm1105 = vcmp.le.s32.totalorder %v1088, %v1104
      %vm1106 = vmxor %vm1105, 1
      %v1107 = vsel %vm1106, 1, 0
      %1108 = vset.pattern.permute.xlu0 1
      %1109 = vperm.xlu0 %1108, %v1107
      %v1110 = vpop.permute.xlu0 %1109
      %vm1111 = vcmp.eq.s32.totalorder %v1110, 1
      %vm1112 = vmand %vm1091, %vm1111
      %vm1113 = vmor %vm1078, %vm1112
      %v1114 = vsel %vm1105, 1, 0
      %1115 = vset.pattern.permute.xlu0 1
      %1116 = vperm.xlu0 %1115, %v1114
      %v1117 = vpop.permute.xlu0 %1116
      %vm1118 = vcmp.eq.s32.totalorder %v1117, 1
      %vm1119 = vmxor %vm1090, %vm1118
      %vm1120 = vmxor %vm1119, 1
      %vm1121 = vmand %vm1086, %vm1120
      %v1122 = vsub.s32 %v1088, %v1104
      %v1123 = vsel %vm1105, %v1088, %v1122
      %v1124 = vand.u32 %v249, 32
      %vm1125 = vcmp.eq.s32.totalorder %v1124, 0
      %vm1126 = vmand %vm1121, %vm1125
      %v1127 = vsel %vm1126, 1, 0
      %v1128 = vand.u32 %v1127, 65535
      %v1129 = vshrl.u32 %v1127, 16
      %v1130 = vcvt.s32.f32 %v1128
      %v1131 = vcvt.s32.f32 %v1129
      %1132 = vadd.xlane.f32.xlu0 %v1130
      %v1133 = vpop.xlane.xlu0 %1132
      %1134 = vadd.xlane.f32.xlu0 %v1131
      %v1135 = vpop.xlane.xlu0 %1134
      %v1136 = vcvt.f32.s32 %v1133
      %v1137 = vcvt.f32.s32 %v1135
      %v1138 = vshll.u32 %v1137, 16
      %v1139 = vadd.s32 %v1138, %v1136
      %vm1140 = vcmp.le.s32.totalorder %v1123, %v1139
      %vm1141 = vmxor %vm1140, 1
      %v1142 = vsel %vm1141, 1, 0
      %1143 = vset.pattern.permute.xlu0 1
      %1144 = vperm.xlu0 %1143, %v1142
      %v1145 = vpop.permute.xlu0 %1144
      %vm1146 = vcmp.eq.s32.totalorder %v1145, 1
      %vm1147 = vmand %vm1126, %vm1146
      %vm1148 = vmor %vm1113, %vm1147
      %v1149 = vsel %vm1140, 1, 0
      %1150 = vset.pattern.permute.xlu0 1
      %1151 = vperm.xlu0 %1150, %v1149
      %v1152 = vpop.permute.xlu0 %1151
      %vm1153 = vcmp.eq.s32.totalorder %v1152, 1
      %vm1154 = vmxor %vm1125, %vm1153
      %vm1155 = vmxor %vm1154, 1
      %vm1156 = vmand %vm1121, %vm1155
      %v1157 = vsub.s32 %v1123, %v1139
      %v1158 = vsel %vm1140, %v1123, %v1157
      %v1159 = vand.u32 %v249, 16
      %vm1160 = vcmp.eq.s32.totalorder %v1159, 0
      %vm1161 = vmand %vm1156, %vm1160
      %v1162 = vsel %vm1161, 1, 0
      %v1163 = vand.u32 %v1162, 65535
      %v1164 = vshrl.u32 %v1162, 16
      %v1165 = vcvt.s32.f32 %v1163
      %v1166 = vcvt.s32.f32 %v1164
      %1167 = vadd.xlane.f32.xlu0 %v1165
      %v1168 = vpop.xlane.xlu0 %1167
      %1169 = vadd.xlane.f32.xlu0 %v1166
      %v1170 = vpop.xlane.xlu0 %1169
      %v1171 = vcvt.f32.s32 %v1168
      %v1172 = vcvt.f32.s32 %v1170
      %v1173 = vshll.u32 %v1172, 16
      %v1174 = vadd.s32 %v1173, %v1171
      %vm1175 = vcmp.le.s32.totalorder %v1158, %v1174
      %vm1176 = vmxor %vm1175, 1
      %v1177 = vsel %vm1176, 1, 0
      %1178 = vset.pattern.permute.xlu0 1
      %1179 = vperm.xlu0 %1178, %v1177
      %v1180 = vpop.permute.xlu0 %1179
      %vm1181 = vcmp.eq.s32.totalorder %v1180, 1
      %vm1182 = vmand %vm1161, %vm1181
      %vm1183 = vmor %vm1148, %vm1182
      %v1184 = vsel %vm1175, 1, 0
      %1185 = vset.pattern.permute.xlu0 1
      %1186 = vperm.xlu0 %1185, %v1184
      %v1187 = vpop.permute.xlu0 %1186
      %vm1188 = vcmp.eq.s32.totalorder %v1187, 1
      %vm1189 = vmxor %vm1160, %vm1188
      %vm1190 = vmxor %vm1189, 1
      %vm1191 = vmand %vm1156, %vm1190
      %v1192 = vsub.s32 %v1158, %v1174
      %v1193 = vsel %vm1175, %v1158, %v1192
      %v1194 = vand.u32 %v249, 8
      %vm1195 = vcmp.eq.s32.totalorder %v1194, 0
      %vm1196 = vmand %vm1191, %vm1195
      %v1197 = vsel %vm1196, 1, 0
      %v1198 = vand.u32 %v1197, 65535
      %v1199 = vshrl.u32 %v1197, 16
      %v1200 = vcvt.s32.f32 %v1198
      %v1201 = vcvt.s32.f32 %v1199
      %1202 = vadd.xlane.f32.xlu0 %v1200
      %v1203 = vpop.xlane.xlu0 %1202
      %1204 = vadd.xlane.f32.xlu0 %v1201
      %v1205 = vpop.xlane.xlu0 %1204
      %v1206 = vcvt.f32.s32 %v1203
      %v1207 = vcvt.f32.s32 %v1205
      %v1208 = vshll.u32 %v1207, 16
      %v1209 = vadd.s32 %v1208, %v1206
      %vm1210 = vcmp.le.s32.totalorder %v1193, %v1209
      %vm1211 = vmxor %vm1210, 1
      %v1212 = vsel %vm1211, 1, 0
      %1213 = vset.pattern.permute.xlu0 1
      %1214 = vperm.xlu0 %1213, %v1212
      %v1215 = vpop.permute.xlu0 %1214
      %vm1216 = vcmp.eq.s32.totalorder %v1215, 1
      %vm1217 = vmand %vm1196, %vm1216
      %vm1218 = vmor %vm1183, %vm1217
      %v1219 = vsel %vm1210, 1, 0
      %1220 = vset.pattern.permute.xlu0 1
      %1221 = vperm.xlu0 %1220, %v1219
      %v1222 = vpop.permute.xlu0 %1221
      %vm1223 = vcmp.eq.s32.totalorder %v1222, 1
      %vm1224 = vmxor %vm1195, %vm1223
      %vm1225 = vmxor %vm1224, 1
      %vm1226 = vmand %vm1191, %vm1225
      %v1227 = vsub.s32 %v1193, %v1209
      %v1228 = vsel %vm1210, %v1193, %v1227
      %v1229 = vand.u32 %v249, 4
      %vm1230 = vcmp.eq.s32.totalorder %v1229, 0
      %vm1231 = vmand %vm1226, %vm1230
      %v1232 = vsel %vm1231, 1, 0
      %v1233 = vand.u32 %v1232, 65535
      %v1234 = vshrl.u32 %v1232, 16
      %v1235 = vcvt.s32.f32 %v1233
      %v1236 = vcvt.s32.f32 %v1234
      %1237 = vadd.xlane.f32.xlu0 %v1235
      %v1238 = vpop.xlane.xlu0 %1237
      %1239 = vadd.xlane.f32.xlu0 %v1236
      %v1240 = vpop.xlane.xlu0 %1239
      %v1241 = vcvt.f32.s32 %v1238
      %v1242 = vcvt.f32.s32 %v1240
      %v1243 = vshll.u32 %v1242, 16
      %v1244 = vadd.s32 %v1243, %v1241
      %vm1245 = vcmp.le.s32.totalorder %v1228, %v1244
      %vm1246 = vmxor %vm1245, 1
      %v1247 = vsel %vm1246, 1, 0
      %1248 = vset.pattern.permute.xlu0 1
      %1249 = vperm.xlu0 %1248, %v1247
      %v1250 = vpop.permute.xlu0 %1249
      %vm1251 = vcmp.eq.s32.totalorder %v1250, 1
      %vm1252 = vmand %vm1231, %vm1251
      %vm1253 = vmor %vm1218, %vm1252
      %v1254 = vsel %vm1245, 1, 0
      %1255 = vset.pattern.permute.xlu0 1
      %1256 = vperm.xlu0 %1255, %v1254
      %v1257 = vpop.permute.xlu0 %1256
      %vm1258 = vcmp.eq.s32.totalorder %v1257, 1
      %vm1259 = vmxor %vm1230, %vm1258
      %vm1260 = vmxor %vm1259, 1
      %vm1261 = vmand %vm1226, %vm1260
      %v1262 = vsub.s32 %v1228, %v1244
      %v1263 = vsel %vm1245, %v1228, %v1262
      %v1264 = vand.u32 %v249, 2
      %vm1265 = vcmp.eq.s32.totalorder %v1264, 0
      %vm1266 = vmand %vm1261, %vm1265
      %v1267 = vsel %vm1266, 1, 0
      %v1268 = vand.u32 %v1267, 65535
      %v1269 = vshrl.u32 %v1267, 16
      %v1270 = vcvt.s32.f32 %v1268
      %v1271 = vcvt.s32.f32 %v1269
      %1272 = vadd.xlane.f32.xlu0 %v1270
      %v1273 = vpop.xlane.xlu0 %1272
      %1274 = vadd.xlane.f32.xlu0 %v1271
      %v1275 = vpop.xlane.xlu0 %1274
      %v1276 = vcvt.f32.s32 %v1273
      %v1277 = vcvt.f32.s32 %v1275
      %v1278 = vshll.u32 %v1277, 16
      %v1279 = vadd.s32 %v1278, %v1276
      %vm1280 = vcmp.le.s32.totalorder %v1263, %v1279
      %vm1281 = vmxor %vm1280, 1
      %v1282 = vsel %vm1281, 1, 0
      %1283 = vset.pattern.permute.xlu0 1
      %1284 = vperm.xlu0 %1283, %v1282
      %v1285 = vpop.permute.xlu0 %1284
      %vm1286 = vcmp.eq.s32.totalorder %v1285, 1
      %vm1287 = vmand %vm1266, %vm1286
      %vm1288 = vmor %vm1253, %vm1287
      %v1289 = vsel %vm1280, 1, 0
      %1290 = vset.pattern.permute.xlu0 1
      %1291 = vperm.xlu0 %1290, %v1289
      %v1292 = vpop.permute.xlu0 %1291
      %vm1293 = vcmp.eq.s32.totalorder %v1292, 1
      %vm1294 = vmxor %vm1265, %vm1293
      %vm1295 = vmxor %vm1294, 1
      %vm1296 = vmand %vm1261, %vm1295
      %v1297 = vsub.s32 %v1263, %v1279
      %v1298 = vsel %vm1280, %v1263, %v1297
      %v1299 = vand.u32 %v249, 1
      %vm1300 = vcmp.eq.s32.totalorder %v1299, 0
      %vm1301 = vmand %vm1296, %vm1300
      %v1302 = vsel %vm1301, 1, 0
      %v1303 = vand.u32 %v1302, 65535
      %v1304 = vshrl.u32 %v1302, 16
      %v1305 = vcvt.s32.f32 %v1303
      %v1306 = vcvt.s32.f32 %v1304
      %1307 = vadd.xlane.f32.xlu0 %v1305
      %v1308 = vpop.xlane.xlu0 %1307
      %1309 = vadd.xlane.f32.xlu0 %v1306
      %v1310 = vpop.xlane.xlu0 %1309
      %v1311 = vcvt.f32.s32 %v1308
      %v1312 = vcvt.f32.s32 %v1310
      %v1313 = vshll.u32 %v1312, 16
      %v1314 = vadd.s32 %v1313, %v1311
      %vm1315 = vcmp.le.s32.totalorder %v1298, %v1314
      %vm1316 = vmxor %vm1315, 1
      %v1317 = vsel %vm1316, 1, 0
      %1318 = vset.pattern.permute.xlu0 1
      %1319 = vperm.xlu0 %1318, %v1317
      %v1320 = vpop.permute.xlu0 %1319
      %vm1321 = vcmp.eq.s32.totalorder %v1320, 1
      %vm1322 = vmand %vm1301, %vm1321
      %vm1323 = vmor %vm1288, %vm1322
      %v1324 = vsel %vm1315, 1, 0
      %1325 = vset.pattern.permute.xlu0 1
      %1326 = vperm.xlu0 %1325, %v1324
      %v1327 = vpop.permute.xlu0 %1326
      %vm1328 = vcmp.eq.s32.totalorder %v1327, 1
      %vm1329 = vmxor %vm1300, %vm1328
      %vm1330 = vmxor %vm1329, 1
      %vm1331 = vmand %vm1296, %vm1330
      %vm1332 = vmor %vm1323, %vm1331
      %v1333 = vsel %vm1332, 1, 0
      %1334 = vst [vmem:[%s237] sm:$0xff] %v1333
      %v1335 = vld [vmem:[%s229] sm:$0xff]
      %v1336 = vsel %vm1332, 103, %v1335
      %1337 = vst [vmem:[%s233] sm:$0xff] %v1336
      %p1338 = scmp.lt.s32.totalorder %s16, 1
      %s1339 = scalar_select %p1338, %s16, 1
      %s1340 = smul.addr %s1339, 8
      %s1341 = scalar_lea.vmem %s3, %s1340
      %p1342 = scmp.lt.s32.totalorder %s16, 1
      %s1343 = scalar_select %p1342, %s16, 1
      %s1344 = smul.addr %s1343, 8
      %s1345 = scalar_lea.vmem %s4, %s1344
      // Predicated region
      $region33: #{text_masking_transform_batch.1} parent=31 // pred_check
        %p1346 = pneg %p112
      $region34: #{text_masking_transform_batch.1} parent=31 // pred_check_branch
        %1348 = sbr.rel (%p1346) target = $region36
      $region35: #{text_masking_transform_batch.1} parent=31 // pred_region
        _
      $region36: #{text_masking_transform_batch.1} parent=31 // pred_fallthru
        _
      // Predicated region
      $region37: #{text_masking_transform_batch.1} parent=31 // pred_check
        %p1349 = pneg %p138
      $region38: #{text_masking_transform_batch.1} parent=31 // pred_check_branch
        %1351 = sbr.rel (%p1349) target = $region40
      $region39: #{text_masking_transform_batch.1} parent=31 // pred_region
        _
      $region40: #{text_masking_transform_batch.1} parent=31 // pred_fallthru
        _
    $region32: #{text_masking_transform_batch.1} parent=5 // pred_fallthru
      _
    %p1352 = scmp.le.s32.totalorder 2, %s11
    // Predicated region
    $region41: #{text_masking_transform_batch.1} parent=5 // pred_check
      %p1353 = pneg %p1352
    $region42: #{text_masking_transform_batch.1} parent=5 // pred_check_branch
      %1355 = sbr.rel (%p1353) target = $region44
    $region43: #{text_masking_transform_batch.1} parent=5 // pred_region
      %s1356 = ssub.s32 %s11, 2
      // Predicated region
      $region45: #{text_masking_transform_batch.1} parent=43 // pred_check
        %p1357 = pneg %p118
      $region46: #{text_masking_transform_batch.1} parent=43 // pred_check_branch
        %1359 = sbr.rel (%p1357) target = $region48
      $region47: #{text_masking_transform_batch.1} parent=43 // pred_region
        %p1360 = scmp.lt.s32.totalorder %s17, 1
        %s1361 = scalar_select %p1360, %s17, 1
        %s1362 = smul.addr %s1361, 8
        %s1363 = scalar_lea.vmem %s3, %s1362
      $region48: #{text_masking_transform_batch.1} parent=43 // pred_fallthru
        _
      // Predicated region
      $region49: #{text_masking_transform_batch.1} parent=43 // pred_check
        %p1364 = pneg %p144
      $region50: #{text_masking_transform_batch.1} parent=43 // pred_check_branch
        %1366 = sbr.rel (%p1364) target = $region52
      $region51: #{text_masking_transform_batch.1} parent=43 // pred_region
        %p1367 = scmp.lt.s32.totalorder %s17, 1
        %s1368 = scalar_select %p1367, %s17, 1
        %s1369 = smul.addr %s1368, 8
        %s1370 = scalar_lea.vmem %s4, %s1369
      $region52: #{text_masking_transform_batch.1} parent=43 // pred_fallthru
        _
    $region44: #{text_masking_transform_batch.1} parent=5 // pred_fallthru
      _
  $region6: #{text_masking_transform_batch.1} parent=0 // loop_footer
    %s15 = sadd.s32 1, %s11
  $region7: #{text_masking_transform_batch.1} parent=0 // loop_footer_branch
    %10 = sbr.rel target = $region3
  $region8: #{text_masking_transform_batch.1} parent=0 // loop_exit
    _

</llo_original>
